<compile_context>
chip_gen: v7x
topology: tpu7x:2x2x1
jax: 0.10.0
libtpu: 0.0.40
codegen_flags: <defaults>
</compile_context>

<pallas_src>
import functools

import jax
import jax.numpy as jnp
from jax.experimental import pallas as pl
from jax.experimental.pallas import tpu as pltpu


def _round_up(v, m):
    return (v + m - 1) // m * m


# --------------------------------------------------------------------------
# Pallas kernel
# --------------------------------------------------------------------------
def _netdeconf_kernel(a_ref, h_ref, t_ref, bgc_ref, wh_ref, bh_ref, wsc_ref,
                      bsm_ref, dist_ref, scal_ref, acc_ref):
    k = pl.program_id(1)

    # ---- init accumulator on the first reduction step ----------------------
    @pl.when(k == 0)
    def _():
        acc_ref[...] = jnp.zeros_like(acc_ref)

    # ---- steady state: A_hat row-tile @ H k-tile (bf16 in, f32 accumulate) -
    acc_ref[...] += jnp.dot(a_ref[...], h_ref[...],
                            preferred_element_type=jnp.float32)

    # ---- epilogue: heads + select + sigmoid, only on the last k step -------
    @pl.when(k == pl.num_programs(1) - 1)
    def _():
        nh = bgc_ref.shape[1]        # nhid
        nh2 = wh_ref.shape[1]        # 2 * nhid

        # GCNConv bias + ReLU  (dropout is identity in eval mode)
        dist = jnp.maximum(acc_ref[...] + bgc_ref[...], 0.0)   # (blk, nhid) f32
        dist_ref[...] = dist

        # fused hidden heads: [y00 | y10] = relu(dist @ [w00|w10] + [b00|b10])
        yh = jnp.maximum(
            jnp.dot(dist, wh_ref[...], preferred_element_type=jnp.float32)
            + bh_ref[...], 0.0)                                  # (blk, 2*nhid)

        t = t_ref[...]                                           # (blk, 1)
        lane = jax.lax.broadcasted_iota(jnp.int32, yh.shape, 1)
        # fold the where(t>0, y1, y0) select into the matmul: keep the y10
        # half when t>0, the y00 half otherwise, zero the rest.
        u = jnp.where(t > 0.0,
                      jnp.where(lane >= nh, yh, 0.0),
                      jnp.where(lane < nh, yh, 0.0))

        # fused scalar heads -> lane-dense (blk, 128):
        #   col 0: u @ [w01 ; w11]   (== y1 rows where t>0, y0 rows otherwise)
        #   col 1: dist @ w_ps       (propensity logit)
        scal = (jnp.dot(u, wsc_ref[:nh2, :],
                        preferred_element_type=jnp.float32)
                + jnp.dot(dist, wsc_ref[nh2:, :],
                          preferred_element_type=jnp.float32))   # (blk, 128)

        col = jax.lax.broadcasted_iota(jnp.int32, scal.shape, 1)
        b_y = jnp.where(t > 0.0, bsm_ref[1], bsm_ref[0])         # per-row bias
        scal = scal + jnp.where(col == 0, b_y,
                                jnp.where(col == 1, bsm_ref[2], 0.0))
        scal_ref[...] = jnp.where(col == 1, jax.nn.sigmoid(scal), scal)


# --------------------------------------------------------------------------
# Wrapper
# --------------------------------------------------------------------------
def netdeconf_forward(x, adj_norm, t, params, cf=False, block=1024):
    """Returns (y [N], dist [N, nhid], propensity_score [N])."""
    n = x.shape[0]
    nhid = params["w_gc"].shape[1]

    # counterfactual flag handled in glue: the kernel sees the effective t.
    t_eff = (1.0 - t) if cf else t
    t_eff = t_eff.reshape(n, 1).astype(jnp.float32)

    # H = X @ W_gc is tiny (N x nhid): compute once in f32, feed bf16 to the
    # kernel; the big A_hat @ H runs on the MXU with an f32 accumulator.
    h = jnp.dot(x.astype(jnp.float32), params["w_gc"].astype(jnp.float32))

    # one tile edge for both the row and reduction axes of A_hat.
    # bf16 1024x1024 tile = 2 MiB (x2 buffers) -> comfortably inside the
    # scoped-VMEM default on v5e/v6e/v7x.
    blk = min(block, _round_up(n, 128))
    n_pad = _round_up(n, blk)
    gm = n_pad // blk

    a_p = jnp.zeros((n_pad, n_pad), jnp.bfloat16
                    ).at[:n, :n].set(adj_norm.astype(jnp.bfloat16))
    h_p = jnp.zeros((n_pad, nhid), jnp.bfloat16
                    ).at[:n, :].set(h.astype(jnp.bfloat16))
    t_p = jnp.zeros((n_pad, 1), jnp.float32).at[:n, :].set(t_eff)

    # fused head parameters (f32 for the tiny epilogue matmuls).
    w_h = jnp.concatenate([params["w00"], params["w10"]], axis=1
                          ).astype(jnp.float32)                   # (nhid, 2*nhid)
    b_h = jnp.concatenate([params["b00"], params["b10"]], axis=1
                          ).astype(jnp.float32)                   # (1, 2*nhid)
    w_sc = jnp.zeros((3 * nhid, 128), jnp.float32)
    w_sc = w_sc.at[0:nhid, 0].set(params["w01"][:, 0])
    w_sc = w_sc.at[nhid:2 * nhid, 0].set(params["w11"][:, 0])
    w_sc = w_sc.at[2 * nhid:, 1].set(params["w_ps"][:, 0])
    b_sm = jnp.stack([params["b01"][0, 0], params["b11"][0, 0],
                      params["b_ps"][0, 0]]).astype(jnp.float32)  # (3,)
    b_gc = params["b_gc"].astype(jnp.float32)

    grid_spec = pltpu.PrefetchScalarGridSpec(
        num_scalar_prefetch=0,
        grid=(gm, gm),
        in_specs=[
            pl.BlockSpec((blk, blk), lambda i, k: (i, k)),        # A_hat tile
            pl.BlockSpec((blk, nhid), lambda i, k: (k, 0)),       # H tile
            pl.BlockSpec((blk, 1), lambda i, k: (i, 0)),          # t
            pl.BlockSpec((1, nhid), lambda i, k: (0, 0)),         # b_gc
            pl.BlockSpec((nhid, 2 * nhid), lambda i, k: (0, 0)),  # [w00|w10]
            pl.BlockSpec((1, 2 * nhid), lambda i, k: (0, 0)),     # [b00|b10]
            pl.BlockSpec((3 * nhid, 128), lambda i, k: (0, 0)),   # fused scalar heads
            pl.BlockSpec(memory_space=pltpu.MemorySpace.SMEM),    # (3,) scalar biases
        ],
        out_specs=[
            pl.BlockSpec((blk, nhid), lambda i, k: (i, 0)),       # dist
            pl.BlockSpec((blk, 128), lambda i, k: (i, 0)),        # [y | ps | 0...]
        ],
        scratch_shapes=[pltpu.VMEM((blk, nhid), jnp.float32)],
    )

    flops = (2 * n_pad * n_pad * nhid            # A_hat @ H
             + 2 * n_pad * nhid * 2 * nhid       # fused hidden heads
             + 2 * n_pad * 3 * nhid * 128)       # fused scalar heads
    bytes_accessed = (n_pad * n_pad * 2 + n_pad * nhid * 2
                      + n_pad * (nhid + 128) * 4)

    dist_p, scal_p = pl.pallas_call(
        _netdeconf_kernel,
        grid_spec=grid_spec,
        out_shape=(
            jax.ShapeDtypeStruct((n_pad, nhid), jnp.float32),
            jax.ShapeDtypeStruct((n_pad, 128), jnp.float32),
        ),
        compiler_params=pltpu.CompilerParams(
            dimension_semantics=("parallel", "arbitrary"),
            vmem_limit_bytes=32 * 1024 * 1024,
        ),
        cost_estimate=pl.CostEstimate(
            flops=flops, transcendentals=n_pad,
            bytes_accessed=bytes_accessed),
    )(a_p, h_p, t_p, b_gc, w_h, b_h, w_sc, b_sm)

    y = scal_p[:n, 0]
    ps = scal_p[:n, 1]
    dist = dist_p[:n, :]
    return y, dist, ps


# --------------------------------------------------------------------------
# Plain-JAX glue: PyG-style symmetric GCN normalization (dense)
# --------------------------------------------------------------------------
def gcn_norm_dense(edge_index, num_nodes):
    src, dst = edge_index[0], edge_index[1]
    a = jnp.zeros((num_nodes, num_nodes), jnp.float32).at[dst, src].add(1.0)
    a = a + jnp.eye(num_nodes, dtype=jnp.float32)     # add self loops
    deg = a.sum(axis=1)
    dinv = jnp.where(deg > 0, 1.0 / jnp.sqrt(deg), 0.0)
    return dinv[:, None] * a * dinv[None, :]


def init_params(key, nfeat, nhid):
    keys = jax.random.split(key, 7)

    def lin(k, fan_in, fan_out):
        kw, kb = jax.random.split(k)
        w = jax.random.normal(kw, (fan_in, fan_out), jnp.float32) * 0.1
        b = jax.random.normal(kb, (1, fan_out), jnp.float32) * 0.1
        return w, b

    p = {}
    p["w_gc"], p["b_gc"] = lin(keys[0], nfeat, nhid)   # GCNConv(nfeat, nhid)
    p["w00"], p["b00"] = lin(keys[1], nhid, nhid)      # out_t00[0]
    p["w10"], p["b10"] = lin(keys[2], nhid, nhid)      # out_t10[0]
    p["w01"], p["b01"] = lin(keys[3], nhid, 1)         # out_t01
    p["w11"], p["b11"] = lin(keys[4], nhid, 1)         # out_t11
    p["w_ps"], p["b_ps"] = lin(keys[5], nhid, 1)       # ps
    return p


def reference_forward(x, adj_norm, t, params, cf=False):
    h = x @ params["w_gc"]
    dist = jnp.maximum(adj_norm @ h + params["b_gc"], 0.0)
    y00 = jnp.maximum(dist @ params["w00"] + params["b00"], 0.0)
    y10 = jnp.maximum(dist @ params["w10"] + params["b10"], 0.0)
    y0 = (y00 @ params["w01"] + params["b01"]).reshape(-1)
    y1 = (y10 @ params["w11"] + params["b11"]).reshape(-1)
    t_eff = (1.0 - t) if cf else t
    y = jnp.where(t_eff > 0, y1, y0)
    ps = jax.nn.sigmoid((dist @ params["w_ps"] + params["b_ps"]).reshape(-1))
    return y, dist, ps


if __name__ == "__main__":
    N_NODES, N_FEAT, N_HID = 16, 8, 32

    key = jax.random.PRNGKey(0)
    k_x, k_t, k_p = jax.random.split(key, 3)

    x = jax.random.normal(k_x, (N_NODES, N_FEAT), jnp.float32)

    # ring graph edge_index (both directions), PyG edge_index format
    idx = jnp.arange(N_NODES)
    src = jnp.concatenate([idx, (idx + 1) % N_NODES])
    dst = jnp.concatenate([(idx + 1) % N_NODES, idx])
    edge_index = jnp.stack([src, dst])

    t = (jax.random.uniform(k_t, (N_NODES,)) > 0.5).astype(jnp.float32)

    params = init_params(k_p, N_FEAT, N_HID)
    adj_norm = gcn_norm_dense(edge_index, N_NODES)

    fwd = jax.jit(functools.partial(netdeconf_forward, cf=False))
    y, dist, propensity = fwd(x, adj_norm, t, params)
    jax.block_until_ready((y, dist, propensity))

    assert y.shape == (N_NODES,)
    assert dist.shape == (N_NODES, N_HID)
    assert propensity.shape == (N_NODES,)

    # correctness vs plain-JAX f32 reference (loose tol: A/H stream in bf16)
    y_r, dist_r, ps_r = reference_forward(x, adj_norm, t, params, cf=False)
    assert float(jnp.max(jnp.abs(y - y_r))) < 5e-2
    assert float(jnp.max(jnp.abs(dist - dist_r))) < 5e-2
    assert float(jnp.max(jnp.abs(propensity - ps_r))) < 5e-2

    # counterfactual branch
    fwd_cf = jax.jit(functools.partial(netdeconf_forward, cf=True))
    y_c, _, _ = fwd_cf(x, adj_norm, t, params)
    y_cr, _, _ = reference_forward(x, adj_norm, t, params, cf=True)
    jax.block_until_ready(y_c)
    assert float(jnp.max(jnp.abs(y_c - y_cr))) < 5e-2

    print("KERNEL_OK")
</pallas_src>

<mosaic_0001>
module attributes {stable_mosaic.version = 11 : i64} {
  func.func @_netdeconf_kernel(%arg0: i32, %arg1: i32, %arg2: memref<128x128xbf16, #tpu.memory_space<vmem>>, %arg3: memref<128x32xbf16, #tpu.memory_space<vmem>>, %arg4: memref<128x1xf32, #tpu.memory_space<vmem>>, %arg5: memref<1x32xf32, #tpu.memory_space<vmem>>, %arg6: memref<32x64xf32, #tpu.memory_space<vmem>>, %arg7: memref<1x64xf32, #tpu.memory_space<vmem>>, %arg8: memref<96x128xf32, #tpu.memory_space<vmem>>, %arg9: memref<3xf32, #tpu.memory_space<smem>>, %arg10: memref<128x32xf32, #tpu.memory_space<vmem>>, %arg11: memref<128x128xf32, #tpu.memory_space<vmem>>, %arg12: memref<128x32xf32, #tpu.memory_space<vmem>>) attributes {dimension_semantics = [#tpu.dimension_semantics<parallel>, #tpu.dimension_semantics<arbitrary>], iteration_bounds = array<i64: 1, 1>, scalar_prefetch = 0 : i64, scratch_operands = 1 : i64, tpu.core_type = #tpu.core_type<tc>, window_params = [{transform_indices = @transform_0, window_bounds = array<i64: 128, 128>}, {transform_indices = @transform_1, window_bounds = array<i64: 128, 32>}, {transform_indices = @transform_2, window_bounds = array<i64: 128, 1>}, {pipeline_mode = #tpu.pipeline_mode<synchronous>, transform_indices = @transform_3, window_bounds = array<i64: 1, 32>}, {pipeline_mode = #tpu.pipeline_mode<synchronous>, transform_indices = @transform_4, window_bounds = array<i64: 32, 64>}, {pipeline_mode = #tpu.pipeline_mode<synchronous>, transform_indices = @transform_5, window_bounds = array<i64: 1, 64>}, {pipeline_mode = #tpu.pipeline_mode<synchronous>, transform_indices = @transform_6, window_bounds = array<i64: 96, 128>}, {transform_indices = @transform_7, window_bounds = array<i64: 3>}, {transform_indices = @transform_8, window_bounds = array<i64: 128, 32>}, {transform_indices = @transform_9, window_bounds = array<i64: 128, 128>}]} {
    %c0_i32 = arith.constant 0 : i32
    %0 = arith.cmpi eq, %arg1, %c0_i32 : i32
    %1 = arith.extui %0 : i1 to i32
    %c0_i32_0 = arith.constant 0 : i32
    %2 = arith.cmpi ne, %1, %c0_i32_0 : i32
    scf.if %2 {
      %cst_10 = arith.constant 0.000000e+00 : f32
      %12 = vector.broadcast %cst_10 : f32 to vector<128x32xf32>
      %c0_11 = arith.constant 0 : index
      %c0_12 = arith.constant 0 : index
      %13 = vector.load %arg12[%c0_11, %c0_12] : memref<128x32xf32, #tpu.memory_space<vmem>>, vector<128x32xf32>
      tpu.vector_store %arg12[%c0_11, %c0_12], %12 {strides = array<i32>} : memref<128x32xf32, #tpu.memory_space<vmem>>, vector<128x32xf32>,
    } else {
    }
    %c0 = arith.constant 0 : index
    %c0_1 = arith.constant 0 : index
    %3 = vector.load %arg12[%c0, %c0_1] : memref<128x32xf32, #tpu.memory_space<vmem>>, vector<128x32xf32>
    %c0_2 = arith.constant 0 : index
    %c0_3 = arith.constant 0 : index
    %4 = vector.load %arg2[%c0_2, %c0_3] : memref<128x128xbf16, #tpu.memory_space<vmem>>, vector<128x128xbf16>
    %c0_4 = arith.constant 0 : index
    %c0_5 = arith.constant 0 : index
    %5 = vector.load %arg3[%c0_4, %c0_5] : memref<128x32xbf16, #tpu.memory_space<vmem>>, vector<128x32xbf16>
    %cst = arith.constant dense<0.000000e+00> : vector<128x32xf32>
    %6 = tpu.matmul %4, %5, %cst {dimension_numbers = #tpu.dot_dimension_numbers<[1], [0], [0], [1], [0, 0, 1, 1], [], []>} : vector<128x128xbf16>, vector<128x32xbf16>, vector<128x32xf32> -> vector<128x32xf32>
    %7 = arith.addf %3, %6 : vector<128x32xf32>
    %c0_6 = arith.constant 0 : index
    %c0_7 = arith.constant 0 : index
    %8 = vector.load %arg12[%c0_6, %c0_7] : memref<128x32xf32, #tpu.memory_space<vmem>>, vector<128x32xf32>
    tpu.vector_store %arg12[%c0_6, %c0_7], %7 {strides = array<i32>} : memref<128x32xf32, #tpu.memory_space<vmem>>, vector<128x32xf32>,
    %c0_i32_8 = arith.constant 0 : i32
    %9 = arith.cmpi eq, %arg1, %c0_i32_8 : i32
    %10 = arith.extui %9 : i1 to i32
    %c0_i32_9 = arith.constant 0 : i32
    %11 = arith.cmpi ne, %10, %c0_i32_9 : i32
    scf.if %11 {
      %c0_10 = arith.constant 0 : index
      %c0_11 = arith.constant 0 : index
      %12 = vector.load %arg12[%c0_10, %c0_11] : memref<128x32xf32, #tpu.memory_space<vmem>>, vector<128x32xf32>
      %c0_12 = arith.constant 0 : index
      %c0_13 = arith.constant 0 : index
      %13 = vector.load %arg5[%c0_12, %c0_13] : memref<1x32xf32, #tpu.memory_space<vmem>>, vector<1x32xf32>
      %14 = vector.broadcast %13 : vector<1x32xf32> to vector<128x32xf32>
      %15 = arith.addf %12, %14 : vector<128x32xf32>
      %cst_14 = arith.constant 0.000000e+00 : f32
      %16 = vector.broadcast %cst_14 : f32 to vector<128x32xf32>
      %17 = arith.maximumf %15, %16 : vector<128x32xf32>
      %c0_15 = arith.constant 0 : index
      %c0_16 = arith.constant 0 : index
      %18 = vector.load %arg10[%c0_15, %c0_16] : memref<128x32xf32, #tpu.memory_space<vmem>>, vector<128x32xf32>
      tpu.vector_store %arg10[%c0_15, %c0_16], %17 {strides = array<i32>} : memref<128x32xf32, #tpu.memory_space<vmem>>, vector<128x32xf32>,
      %c0_17 = arith.constant 0 : index
      %c0_18 = arith.constant 0 : index
      %19 = vector.load %arg6[%c0_17, %c0_18] : memref<32x64xf32, #tpu.memory_space<vmem>>, vector<32x64xf32>
      %cst_19 = arith.constant dense<0.000000e+00> : vector<128x64xf32>
      %20 = tpu.matmul %17, %19, %cst_19 {dimension_numbers = #tpu.dot_dimension_numbers<[1], [0], [0], [1], [0, 0, 1, 1], [], []>} : vector<128x32xf32>, vector<32x64xf32>, vector<128x64xf32> -> vector<128x64xf32>
      %c0_20 = arith.constant 0 : index
      %c0_21 = arith.constant 0 : index
      %21 = vector.load %arg7[%c0_20, %c0_21] : memref<1x64xf32, #tpu.memory_space<vmem>>, vector<1x64xf32>
      %22 = vector.broadcast %21 : vector<1x64xf32> to vector<128x64xf32>
      %23 = arith.addf %20, %22 : vector<128x64xf32>
      %cst_22 = arith.constant 0.000000e+00 : f32
      %24 = vector.broadcast %cst_22 : f32 to vector<128x64xf32>
      %25 = arith.maximumf %23, %24 : vector<128x64xf32>
      %c0_23 = arith.constant 0 : index
      %c0_24 = arith.constant 0 : index
      %26 = vector.load %arg4[%c0_23, %c0_24] : memref<128x1xf32, #tpu.memory_space<vmem>>, vector<128x1xf32>
      %27 = tpu.iota {dimensions = array<i32: 1>} : vector<128x64xi32>
      %cst_25 = arith.constant 0.000000e+00 : f32
      %28 = vector.broadcast %cst_25 : f32 to vector<128x1xf32>
      %29 = arith.cmpf ogt, %26, %28 : vector<128x1xf32>
      %c32_i32 = arith.constant 32 : i32
      %30 = vector.broadcast %c32_i32 : i32 to vector<128x64xi32>
      %31 = arith.cmpi sge, %27, %30 : vector<128x64xi32>
      %cst_26 = arith.constant 0.000000e+00 : f32
      %32 = vector.broadcast %cst_26 : f32 to vector<128x64xf32>
      %33 = arith.select %31, %25, %32 : vector<128x64xi1>, vector<128x64xf32>
      %c32_i32_27 = arith.constant 32 : i32
      %34 = vector.broadcast %c32_i32_27 : i32 to vector<128x64xi32>
      %35 = arith.cmpi slt, %27, %34 : vector<128x64xi32>
      %cst_28 = arith.constant 0.000000e+00 : f32
      %36 = vector.broadcast %cst_28 : f32 to vector<128x64xf32>
      %37 = arith.select %35, %25, %36 : vector<128x64xi1>, vector<128x64xf32>
      %38 = vector.shape_cast %29 : vector<128x1xi1> to vector<128x1xi1>
      %39 = vector.broadcast %38 : vector<128x1xi1> to vector<128x64xi1>
      %40 = arith.select %39, %33, %37 : vector<128x64xi1>, vector<128x64xf32>
      %c0_29 = arith.constant 0 : index
      %c0_30 = arith.constant 0 : index
      %41 = vector.load %arg8[%c0_29, %c0_30] : memref<96x128xf32, #tpu.memory_space<vmem>>, vector<64x128xf32>
      %cst_31 = arith.constant dense<0.000000e+00> : vector<128x128xf32>
      %42 = tpu.matmul %40, %41, %cst_31 {dimension_numbers = #tpu.dot_dimension_numbers<[1], [0], [0], [1], [0, 0, 1, 1], [], []>} : vector<128x64xf32>, vector<64x128xf32>, vector<128x128xf32> -> vector<128x128xf32>
      %c64 = arith.constant 64 : index
      %c0_32 = arith.constant 0 : index
      %43 = vector.load %arg8[%c64, %c0_32] : memref<96x128xf32, #tpu.memory_space<vmem>>, vector<32x128xf32>
      %cst_33 = arith.constant dense<0.000000e+00> : vector<128x128xf32>
      %44 = tpu.matmul %17, %43, %cst_33 {dimension_numbers = #tpu.dot_dimension_numbers<[1], [0], [0], [1], [0, 0, 1, 1], [], []>} : vector<128x32xf32>, vector<32x128xf32>, vector<128x128xf32> -> vector<128x128xf32>
      %45 = arith.addf %42, %44 : vector<128x128xf32>
      %46 = tpu.iota {dimensions = array<i32: 1>} : vector<128x128xi32>
      %cst_34 = arith.constant 0.000000e+00 : f32
      %47 = vector.broadcast %cst_34 : f32 to vector<128x1xf32>
      %48 = arith.cmpf ogt, %26, %47 : vector<128x1xf32>
      %c1 = arith.constant 1 : index
      %49 = memref.load %arg9[%c1] : memref<3xf32, #tpu.memory_space<smem>>
      %c0_35 = arith.constant 0 : index
      %50 = memref.load %arg9[%c0_35] : memref<3xf32, #tpu.memory_space<smem>>
      %51 = vector.broadcast %49 : f32 to vector<128x1xf32>
      %52 = vector.broadcast %50 : f32 to vector<128x1xf32>
      %53 = arith.select %48, %51, %52 : vector<128x1xi1>, vector<128x1xf32>
      %c0_i32_36 = arith.constant 0 : i32
      %54 = vector.broadcast %c0_i32_36 : i32 to vector<128x128xi32>
      %55 = arith.cmpi eq, %46, %54 : vector<128x128xi32>
      %c1_i32 = arith.constant 1 : i32
      %56 = vector.broadcast %c1_i32 : i32 to vector<128x128xi32>
      %57 = arith.cmpi eq, %46, %56 : vector<128x128xi32>
      %c2 = arith.constant 2 : index
      %58 = memref.load %arg9[%c2] : memref<3xf32, #tpu.memory_space<smem>>
      %cst_37 = arith.constant 0.000000e+00 : f32
      %59 = vector.broadcast %58 : f32 to vector<128x128xf32>
      %60 = vector.broadcast %cst_37 : f32 to vector<128x128xf32>
      %61 = arith.select %57, %59, %60 : vector<128x128xi1>, vector<128x128xf32>
      %62 = vector.shape_cast %53 : vector<128x1xf32> to vector<128x1xf32>
      %63 = vector.broadcast %62 : vector<128x1xf32> to vector<128x128xf32>
      %64 = arith.select %55, %63, %61 : vector<128x128xi1>, vector<128x128xf32>
      %65 = arith.addf %45, %64 : vector<128x128xf32>
      %c1_i32_38 = arith.constant 1 : i32
      %66 = vector.broadcast %c1_i32_38 : i32 to vector<128x128xi32>
      %67 = arith.cmpi eq, %46, %66 : vector<128x128xi32>
      %68 = arith.negf %65 : vector<128x128xf32>
      %69 = math.exp %68 : vector<128x128xf32>
      %cst_39 = arith.constant 1.000000e+00 : f32
      %70 = vector.broadcast %cst_39 : f32 to vector<128x128xf32>
      %71 = arith.addf %70, %69 : vector<128x128xf32>
      %72 = arith.divf %70, %71 : vector<128x128xf32>
      %73 = arith.select %67, %72, %65 : vector<128x128xi1>, vector<128x128xf32>
      %c0_40 = arith.constant 0 : index
      %c0_41 = arith.constant 0 : index
      %74 = vector.load %arg11[%c0_40, %c0_41] : memref<128x128xf32, #tpu.memory_space<vmem>>, vector<128x128xf32>
      tpu.vector_store %arg11[%c0_40, %c0_41], %73 {strides = array<i32>} : memref<128x128xf32, #tpu.memory_space<vmem>>, vector<128x128xf32>,
    } else {
    }
    return
  }
  func.func @transform_0(%arg0: i32, %arg1: i32) -> (i32, i32) {
    %c0_i32 = arith.constant 0 : i32
    return %arg0, %arg1 : i32, i32
  }
  func.func @transform_1(%arg0: i32, %arg1: i32) -> (i32, i32) {
    %c0_i32 = arith.constant 0 : i32
    %c0_i32_0 = arith.constant 0 : i32
    return %arg1, %c0_i32 : i32, i32
  }
  func.func @transform_2(%arg0: i32, %arg1: i32) -> (i32, i32) {
    %c0_i32 = arith.constant 0 : i32
    %c0_i32_0 = arith.constant 0 : i32
    return %arg0, %c0_i32 : i32, i32
  }
  func.func @transform_3(%arg0: i32, %arg1: i32) -> (i32, i32) {
    %c0_i32 = arith.constant 0 : i32
    %c0_i32_0 = arith.constant 0 : i32
    %c0_i32_1 = arith.constant 0 : i32
    return %c0_i32, %c0_i32_0 : i32, i32
  }
  func.func @transform_4(%arg0: i32, %arg1: i32) -> (i32, i32) {
    %c0_i32 = arith.constant 0 : i32
    %c0_i32_0 = arith.constant 0 : i32
    %c0_i32_1 = arith.constant 0 : i32
    return %c0_i32, %c0_i32_0 : i32, i32
  }
  func.func @transform_5(%arg0: i32, %arg1: i32) -> (i32, i32) {
    %c0_i32 = arith.constant 0 : i32
    %c0_i32_0 = arith.constant 0 : i32
    %c0_i32_1 = arith.constant 0 : i32
    return %c0_i32, %c0_i32_0 : i32, i32
  }
  func.func @transform_6(%arg0: i32, %arg1: i32) -> (i32, i32) {
    %c0_i32 = arith.constant 0 : i32
    %c0_i32_0 = arith.constant 0 : i32
    %c0_i32_1 = arith.constant 0 : i32
    return %c0_i32, %c0_i32_0 : i32, i32
  }
  func.func @transform_7(%arg0: i32, %arg1: i32) -> i32 {
    %c0_i32 = arith.constant 0 : i32
    %c0_i32_0 = arith.constant 0 : i32
    return %c0_i32 : i32
  }
  func.func @transform_8(%arg0: i32, %arg1: i32) -> (i32, i32) {
    %c0_i32 = arith.constant 0 : i32
    %c0_i32_0 = arith.constant 0 : i32
    return %arg0, %c0_i32 : i32, i32
  }
  func.func @transform_9(%arg0: i32, %arg1: i32) -> (i32, i32) {
    %c0_i32 = arith.constant 0 : i32
    %c0_i32_0 = arith.constant 0 : i32
    return %arg0, %c0_i32 : i32, i32
  }
}

</mosaic_0001>

<llo_original>
// kernel: netdeconf_forward.1
$region0: #{netdeconf_forward.1}
  #allocation0 [shape = 'u32[]', space=smem, size = 0x4, offset = 0x4, fixed_abs, tag = 'smem constant byte address 0x4 - core index']
  #allocation1 [shape = 'u32[144,128]{1,0:T(1,128)}', space=vmem, size = 0x12000, scoped, tag = 'internal scratch']
  #allocation2 [shape = 'f32[128,32]{1,0:T(8,128)}', space=vmem, size = 0x10000, scoped, tag = 'scratch operand']
  %s0 = inlined_call_operand.vmem [shape: bf16[128,128], index: 0, kind: input, shape index: {}]
  %s1 = inlined_call_operand.vmem [shape: bf16[128,32], index: 1, kind: input, shape index: {}]
  %s2 = inlined_call_operand.vmem [shape: f32[128,1], index: 2, kind: input, shape index: {}]
  %s3 = inlined_call_operand.vmem [shape: f32[1,32], index: 3, kind: input, shape index: {}]
  %s4 = inlined_call_operand.vmem [shape: f32[32,64], index: 4, kind: input, shape index: {}]
  %s5 = inlined_call_operand.vmem [shape: f32[1,64], index: 5, kind: input, shape index: {}]
  %s6 = inlined_call_operand.vmem [shape: f32[96,128], index: 6, kind: input, shape index: {}]
  %s7 = inlined_call_operand.vmem [shape: f32[3], index: 7, kind: input, shape index: {}]
  %s8 = inlined_call_operand.vmem [shape: f32[128,32], index: 8, kind: output, shape index: {0}]
  %s9 = inlined_call_operand.vmem [shape: f32[128,128], index: 9, kind: output, shape index: {1}]
  %10 = xla_tuple %s8, %s9
  %s11 = sld [smem:[#allocation0]]
  $region62: #{netdeconf_forward.1} parent=0
    _
  %s13 = ssub.s32 1, %s11
  %s14 = scalar_select 0, %s13, %s11
  $region1: #{netdeconf_forward.1} parent=0
    #allocation3 [shape = 'u8[512]{0}', space=smem, size = 0x200, scoped, tag = 'input window, operand 7, single buffered']
    #allocation4 [shape = 's32[1]{0}', space=sflag, size = 0x4, scoped, tag = 'scoped memory for netdeconf_forward.1']
    %15 = vsyncpa [#allocation4], 0
    // Predicated region
    $region2: #{netdeconf_forward.1} parent=1 // pred_check
      _
    $region3: #{netdeconf_forward.1} parent=1 // pred_check_branch
      %17 = sbr.rel (0) target = $region5
    $region4: #{netdeconf_forward.1} parent=1 // pred_region
      _
    $region5: #{netdeconf_forward.1} parent=1 // pred_fallthru
      _
    // Predicated region
    $region6: #{netdeconf_forward.1} parent=1 // pred_check
      _
    $region7: #{netdeconf_forward.1} parent=1 // pred_check_branch
      %19 = sbr.rel (0) target = $region9
    $region8: #{netdeconf_forward.1} parent=1 // pred_region
      _
    $region9: #{netdeconf_forward.1} parent=1 // pred_fallthru
      _
    // Predicated region
    $region10: #{netdeconf_forward.1} parent=1 // pred_check
      _
    $region11: #{netdeconf_forward.1} parent=1 // pred_check_branch
      %21 = sbr.rel (0) target = $region13
    $region12: #{netdeconf_forward.1} parent=1 // pred_region
      _
    $region13: #{netdeconf_forward.1} parent=1 // pred_fallthru
      _
    // Predicated region
    $region14: #{netdeconf_forward.1} parent=1 // pred_check
      _
    $region15: #{netdeconf_forward.1} parent=1 // pred_check_branch
      %23 = sbr.rel (0) target = $region17
    $region16: #{netdeconf_forward.1} parent=1 // pred_region
      _
    $region17: #{netdeconf_forward.1} parent=1 // pred_fallthru
      _
    // Predicated region
    $region18: #{netdeconf_forward.1} parent=1 // pred_check
      _
    $region19: #{netdeconf_forward.1} parent=1 // pred_check_branch
      %25 = sbr.rel (0) target = $region21
    $region20: #{netdeconf_forward.1} parent=1 // pred_region
      _
    $region21: #{netdeconf_forward.1} parent=1 // pred_fallthru
      _
    // Predicated region
    $region22: #{netdeconf_forward.1} parent=1 // pred_check
      _
    $region23: #{netdeconf_forward.1} parent=1 // pred_check_branch
      %27 = sbr.rel (0) target = $region25
    $region24: #{netdeconf_forward.1} parent=1 // pred_region
      _
    $region25: #{netdeconf_forward.1} parent=1 // pred_fallthru
      _
    // Predicated region
    $region26: #{netdeconf_forward.1} parent=1 // pred_check
      _
    $region27: #{netdeconf_forward.1} parent=1 // pred_check_branch
      %29 = sbr.rel (0) target = $region29
    $region28: #{netdeconf_forward.1} parent=1 // pred_region
      _
    $region29: #{netdeconf_forward.1} parent=1 // pred_fallthru
      _
    // Predicated region
    $region30: #{netdeconf_forward.1} parent=1 // pred_check
      _
    $region31: #{netdeconf_forward.1} parent=1 // pred_check_branch
      %31 = sbr.rel (0) target = $region33
    $region32: #{netdeconf_forward.1} parent=1 // pred_region
      %s33 = ssub.s32 16, 16
      %34 = vsyncadd [#allocation4], %s33
      %s36 = sshll.u32 %s7, 4
      %s37 = int_to_ptr.vmem [resolvable:$true] %s36
      %39 = dma.vmem_to_smem %s37, 16, [#allocation3], [#allocation4]
    $region33: #{netdeconf_forward.1} parent=1 // pred_fallthru
      _
    // Predicated region
    $region34: #{netdeconf_forward.1} parent=1 // pred_check
      _
    $region35: #{netdeconf_forward.1} parent=1 // pred_check_branch
      %41 = sbr.rel (0) target = $region37
    $region36: #{netdeconf_forward.1} parent=1 // pred_region
      %42 = dma.done [#allocation4], 16
    $region37: #{netdeconf_forward.1} parent=1 // pred_fallthru
      _
    %43 = sfence
    %p45 = scmp.eq.s32.totalorder 0, 0
    // Predicated region
    $region38: #{netdeconf_forward.1} parent=1 // pred_check
      %p46 = pneg %p45
    $region39: #{netdeconf_forward.1} parent=1 // pred_check_branch
      %48 = sbr.rel (%p46) target = $region41
    $region40: #{netdeconf_forward.1} parent=1 // pred_region
      %vm49 = vcmask 261120
      %50 = vst.msk [vmem:[#allocation2] sm:$0xff] %vm49, 0.0
      %51 = vst.msk [vmem:[#allocation2 + $0x8] sm:$0xff] %vm49, 0.0
      %52 = vst.msk [vmem:[#allocation2 + $0x10] sm:$0xff] %vm49, 0.0
      %53 = vst.msk [vmem:[#allocation2 + $0x18] sm:$0xff] %vm49, 0.0
      %54 = vst.msk [vmem:[#allocation2 + $0x20] sm:$0xff] %vm49, 0.0
      %55 = vst.msk [vmem:[#allocation2 + $0x28] sm:$0xff] %vm49, 0.0
      %56 = vst.msk [vmem:[#allocation2 + $0x30] sm:$0xff] %vm49, 0.0
      %57 = vst.msk [vmem:[#allocation2 + $0x38] sm:$0xff] %vm49, 0.0
      %58 = vst.msk [vmem:[#allocation2 + $0x40] sm:$0xff] %vm49, 0.0
      %59 = vst.msk [vmem:[#allocation2 + $0x48] sm:$0xff] %vm49, 0.0
      %60 = vst.msk [vmem:[#allocation2 + $0x50] sm:$0xff] %vm49, 0.0
      %61 = vst.msk [vmem:[#allocation2 + $0x58] sm:$0xff] %vm49, 0.0
      %62 = vst.msk [vmem:[#allocation2 + $0x60] sm:$0xff] %vm49, 0.0
      %63 = vst.msk [vmem:[#allocation2 + $0x68] sm:$0xff] %vm49, 0.0
      %64 = vst.msk [vmem:[#allocation2 + $0x70] sm:$0xff] %vm49, 0.0
      %65 = vst.msk [vmem:[#allocation2 + $0x78] sm:$0xff] %vm49, 0.0
    $region41: #{netdeconf_forward.1} parent=1 // pred_fallthru
      _
    %v66 = vld [vmem:[#allocation2] sm:$0xff]
    %v67 = vld [vmem:[#allocation2 + $0x8] sm:$0xff]
    %v68 = vld [vmem:[#allocation2 + $0x10] sm:$0xff]
    %v69 = vld [vmem:[#allocation2 + $0x18] sm:$0xff]
    %v70 = vld [vmem:[#allocation2 + $0x20] sm:$0xff]
    %v71 = vld [vmem:[#allocation2 + $0x28] sm:$0xff]
    %v72 = vld [vmem:[#allocation2 + $0x30] sm:$0xff]
    %v73 = vld [vmem:[#allocation2 + $0x38] sm:$0xff]
    %v74 = vld [vmem:[#allocation2 + $0x40] sm:$0xff]
    %v75 = vld [vmem:[#allocation2 + $0x48] sm:$0xff]
    %v76 = vld [vmem:[#allocation2 + $0x50] sm:$0xff]
    %v77 = vld [vmem:[#allocation2 + $0x58] sm:$0xff]
    %v78 = vld [vmem:[#allocation2 + $0x60] sm:$0xff]
    %v79 = vld [vmem:[#allocation2 + $0x68] sm:$0xff]
    %v80 = vld [vmem:[#allocation2 + $0x70] sm:$0xff]
    %v81 = vld [vmem:[#allocation2 + $0x78] sm:$0xff]
    %v82 = vld [vmem:[%s0] sm:$0xf]
    %v83 = vld [vmem:[%s0 + $0x4] sm:$0xf]
    %v84 = vld [vmem:[%s0 + $0x8] sm:$0xf]
    %v85 = vld [vmem:[%s0 + $0xc] sm:$0xf]
    %v86 = vld [vmem:[%s0 + $0x10] sm:$0xf]
    %v87 = vld [vmem:[%s0 + $0x14] sm:$0xf]
    %v88 = vld [vmem:[%s0 + $0x18] sm:$0xf]
    %v89 = vld [vmem:[%s0 + $0x1c] sm:$0xf]
    %v90 = vld [vmem:[%s0 + $0x20] sm:$0xf]
    %v91 = vld [vmem:[%s0 + $0x24] sm:$0xf]
    %v92 = vld [vmem:[%s0 + $0x28] sm:$0xf]
    %v93 = vld [vmem:[%s0 + $0x2c] sm:$0xf]
    %v94 = vld [vmem:[%s0 + $0x30] sm:$0xf]
    %v95 = vld [vmem:[%s0 + $0x34] sm:$0xf]
    %v96 = vld [vmem:[%s0 + $0x38] sm:$0xf]
    %v97 = vld [vmem:[%s0 + $0x3c] sm:$0xf]
    %v98 = vld [vmem:[%s1] sm:$0xf]
    %v99 = vld [vmem:[%s1 + $0x4] sm:$0xf]
    %v100 = vld [vmem:[%s1 + $0x8] sm:$0xf]
    %v101 = vld [vmem:[%s1 + $0xc] sm:$0xf]
    %v102 = vld [vmem:[%s1 + $0x10] sm:$0xf]
    %v103 = vld [vmem:[%s1 + $0x14] sm:$0xf]
    %v104 = vld [vmem:[%s1 + $0x18] sm:$0xf]
    %v105 = vld [vmem:[%s1 + $0x1c] sm:$0xf]
    %v106 = vld [vmem:[%s1 + $0x20] sm:$0xf]
    %v107 = vld [vmem:[%s1 + $0x24] sm:$0xf]
    %v108 = vld [vmem:[%s1 + $0x28] sm:$0xf]
    %v109 = vld [vmem:[%s1 + $0x2c] sm:$0xf]
    %v110 = vld [vmem:[%s1 + $0x30] sm:$0xf]
    %v111 = vld [vmem:[%s1 + $0x34] sm:$0xf]
    %v112 = vld [vmem:[%s1 + $0x38] sm:$0xf]
    %v113 = vld [vmem:[%s1 + $0x3c] sm:$0xf]
    %v130 = vunpack.c.l.b16 %v82
    %v131 = vunpack.c.l.b16 %v83
    %v132 = vunpack.c.l.b16 %v84
    %v133 = vunpack.c.l.b16 %v85
    %v134 = vunpack.c.l.b16 %v86
    %v135 = vunpack.c.l.b16 %v87
    %v136 = vunpack.c.l.b16 %v88
    %v137 = vunpack.c.l.b16 %v89
    %v138 = vunpack.c.l.b16 %v90
    %v139 = vunpack.c.l.b16 %v91
    %v140 = vunpack.c.l.b16 %v92
    %v141 = vunpack.c.l.b16 %v93
    %v142 = vunpack.c.l.b16 %v94
    %v143 = vunpack.c.l.b16 %v95
    %v144 = vunpack.c.l.b16 %v96
    %v145 = vunpack.c.l.b16 %v97
    %v146 = vpack.c.b16 %v131, %v130
    %v147 = vpack.c.b16 %v133, %v132
    %v148 = vpack.c.b16 %v135, %v134
    %v149 = vpack.c.b16 %v137, %v136
    %v150 = vpack.c.b16 %v139, %v138
    %v151 = vpack.c.b16 %v141, %v140
    %v152 = vpack.c.b16 %v143, %v142
    %v153 = vpack.c.b16 %v145, %v144
    %v178 = vunpack.c.l.b16 %v98
    %v179 = vunpack.c.l.b16 %v99
    %v180 = vunpack.c.l.b16 %v100
    %v181 = vunpack.c.l.b16 %v101
    %v182 = vunpack.c.l.b16 %v102
    %v183 = vunpack.c.l.b16 %v103
    %v184 = vunpack.c.l.b16 %v104
    %v185 = vunpack.c.l.b16 %v105
    %v186 = vunpack.c.l.b16 %v106
    %v187 = vunpack.c.l.b16 %v107
    %v188 = vunpack.c.l.b16 %v108
    %v189 = vunpack.c.l.b16 %v109
    %v190 = vunpack.c.l.b16 %v110
    %v191 = vunpack.c.l.b16 %v111
    %v192 = vunpack.c.l.b16 %v112
    %v193 = vunpack.c.l.b16 %v113
    %v194 = vpack.c.b16 %v179, %v178
    %v195 = vpack.c.b16 %v181, %v180
    %v196 = vpack.c.b16 %v183, %v182
    %v197 = vpack.c.b16 %v185, %v184
    %v198 = vpack.c.b16 %v187, %v186
    %v199 = vpack.c.b16 %v189, %v188
    %v200 = vpack.c.b16 %v191, %v190
    %v201 = vpack.c.b16 %v193, %v192
    %210 = vmatprep.subr.bf16.mxu0 0
    %211 = vmatpush1.bf16.msra.mxu0 %v194
    %212 = vmatprep.subr.bf16.mxu0 0
    %213 = vmatpush1.bf16.msra.mxu0 %v195
    %214 = vmatprep.subr.bf16.mxu0 0
    %215 = vmatpush1.bf16.msra.mxu0 %v196
    %216 = vmatprep.subr.bf16.mxu0 0
    %217 = vmatpush1.bf16.msra.mxu0 %v197
    %218 = vmatprep.subr.bf16.mxu0 0
    %219 = vmatpush1.bf16.msra.mxu0 %v198
    %220 = vmatprep.subr.bf16.mxu0 0
    %221 = vmatpush1.bf16.msra.mxu0 %v199
    %222 = vmatprep.subr.bf16.mxu0 0
    %223 = vmatpush1.bf16.msra.mxu0 %v200
    %224 = vmatprep.subr.bf16.mxu0 0
    %225 = vmatpush1.bf16.msra.mxu0 %v201
    %226 = vmatprep.subr.bf16.mxu0 0
    %227 = vmatpush1.bf16.msra.mxu0 0
    %228 = vmatprep.subr.bf16.mxu0 0
    %229 = vmatpush1.bf16.msra.mxu0 0
    %230 = vmatprep.subr.bf16.mxu0 0
    %231 = vmatpush1.bf16.msra.mxu0 0
    %232 = vmatprep.subr.bf16.mxu0 0
    %233 = vmatpush1.bf16.msra.mxu0 0
    %234 = vmatprep.subr.bf16.mxu0 0
    %235 = vmatpush1.bf16.msra.mxu0 0
    %236 = vmatprep.subr.bf16.mxu0 0
    %237 = vmatpush1.bf16.msra.mxu0 0
    %238 = vmatprep.subr.bf16.mxu0 0
    %239 = vmatpush1.bf16.msra.mxu0 0
    %240 = vmatprep.subr.bf16.mxu0 0
    %241 = vmatpush1.bf16.msra.mxu0 0
    %242 = vmatprep.mubr.bf16.mxu0 0
    %243 = vmatmul.mubr.bf16.gmra.mrb[0].mxu0 %v146
    %v244 = vpop.f32.mrb[0].mxu0
    %v245 = vadd.f32 0.0, %v244
    %v246 = vpop.f32.mrb[0].mxu0
    %v247 = vpop.f32.mrb[0].mxu0
    %v248 = vadd.f32 0.0, %v247
    %v249 = vpop.f32.mrb[0].mxu0
    %250 = vmatprep.mubr.bf16.mxu0 0
    %251 = vmatmul.mubr.bf16.gmra.mrb[0].mxu0 %v147
    %v252 = vpop.f32.mrb[0].mxu0
    %v253 = vadd.f32 0.0, %v252
    %v254 = vpop.f32.mrb[0].mxu0
    %v255 = vpop.f32.mrb[0].mxu0
    %v256 = vadd.f32 0.0, %v255
    %v257 = vpop.f32.mrb[0].mxu0
    %258 = vmatprep.mubr.bf16.mxu0 0
    %259 = vmatmul.mubr.bf16.gmra.mrb[0].mxu0 %v148
    %v260 = vpop.f32.mrb[0].mxu0
    %v261 = vadd.f32 0.0, %v260
    %v262 = vpop.f32.mrb[0].mxu0
    %v263 = vpop.f32.mrb[0].mxu0
    %v264 = vadd.f32 0.0, %v263
    %v265 = vpop.f32.mrb[0].mxu0
    %266 = vmatprep.mubr.bf16.mxu0 0
    %267 = vmatmul.mubr.bf16.gmra.mrb[0].mxu0 %v149
    %v268 = vpop.f32.mrb[0].mxu0
    %v269 = vadd.f32 0.0, %v268
    %v270 = vpop.f32.mrb[0].mxu0
    %v271 = vpop.f32.mrb[0].mxu0
    %v272 = vadd.f32 0.0, %v271
    %v273 = vpop.f32.mrb[0].mxu0
    %274 = vmatprep.mubr.bf16.mxu0 0
    %275 = vmatmul.mubr.bf16.gmra.mrb[0].mxu0 %v150
    %v276 = vpop.f32.mrb[0].mxu0
    %v277 = vadd.f32 0.0, %v276
    %v278 = vpop.f32.mrb[0].mxu0
    %v279 = vpop.f32.mrb[0].mxu0
    %v280 = vadd.f32 0.0, %v279
    %v281 = vpop.f32.mrb[0].mxu0
    %282 = vmatprep.mubr.bf16.mxu0 0
    %283 = vmatmul.mubr.bf16.gmra.mrb[0].mxu0 %v151
    %v284 = vpop.f32.mrb[0].mxu0
    %v285 = vadd.f32 0.0, %v284
    %v286 = vpop.f32.mrb[0].mxu0
    %v287 = vpop.f32.mrb[0].mxu0
    %v288 = vadd.f32 0.0, %v287
    %v289 = vpop.f32.mrb[0].mxu0
    %290 = vmatprep.mubr.bf16.mxu0 0
    %291 = vmatmul.mubr.bf16.gmra.mrb[0].mxu0 %v152
    %v292 = vpop.f32.mrb[0].mxu0
    %v293 = vadd.f32 0.0, %v292
    %v294 = vpop.f32.mrb[0].mxu0
    %v295 = vpop.f32.mrb[0].mxu0
    %v296 = vadd.f32 0.0, %v295
    %v297 = vpop.f32.mrb[0].mxu0
    %298 = vmatprep.mubr.bf16.mxu0 0
    %299 = vmatmul.mubr.bf16.gmra.mrb[0].mxu0 %v153
    %v300 = vpop.f32.mrb[0].mxu0
    %v301 = vadd.f32 0.0, %v300
    %v302 = vpop.f32.mrb[0].mxu0
    %v303 = vpop.f32.mrb[0].mxu0
    %v304 = vadd.f32 0.0, %v303
    %v305 = vpop.f32.mrb[0].mxu0
    %306 = vdwg.mxu0
    %v307 = vadd.f32 %v66, %v245
    %v308 = vadd.f32 %v67, %v248
    %v309 = vadd.f32 %v68, %v253
    %v310 = vadd.f32 %v69, %v256
    %v311 = vadd.f32 %v70, %v261
    %v312 = vadd.f32 %v71, %v264
    %v313 = vadd.f32 %v72, %v269
    %v314 = vadd.f32 %v73, %v272
    %v315 = vadd.f32 %v74, %v277
    %v316 = vadd.f32 %v75, %v280
    %v317 = vadd.f32 %v76, %v285
    %v318 = vadd.f32 %v77, %v288
    %v319 = vadd.f32 %v78, %v293
    %v320 = vadd.f32 %v79, %v296
    %v321 = vadd.f32 %v80, %v301
    %v322 = vadd.f32 %v81, %v304
    %vm323 = vcmask 261120
    %324 = vst.msk [vmem:[#allocation2] sm:$0xff] %vm323, %v307
    %325 = vst.msk [vmem:[#allocation2 + $0x8] sm:$0xff] %vm323, %v308
    %326 = vst.msk [vmem:[#allocation2 + $0x10] sm:$0xff] %vm323, %v309
    %327 = vst.msk [vmem:[#allocation2 + $0x18] sm:$0xff] %vm323, %v310
    %328 = vst.msk [vmem:[#allocation2 + $0x20] sm:$0xff] %vm323, %v311
    %329 = vst.msk [vmem:[#allocation2 + $0x28] sm:$0xff] %vm323, %v312
    %330 = vst.msk [vmem:[#allocation2 + $0x30] sm:$0xff] %vm323, %v313
    %331 = vst.msk [vmem:[#allocation2 + $0x38] sm:$0xff] %vm323, %v314
    %332 = vst.msk [vmem:[#allocation2 + $0x40] sm:$0xff] %vm323, %v315
    %333 = vst.msk [vmem:[#allocation2 + $0x48] sm:$0xff] %vm323, %v316
    %334 = vst.msk [vmem:[#allocation2 + $0x50] sm:$0xff] %vm323, %v317
    %335 = vst.msk [vmem:[#allocation2 + $0x58] sm:$0xff] %vm323, %v318
    %336 = vst.msk [vmem:[#allocation2 + $0x60] sm:$0xff] %vm323, %v319
    %337 = vst.msk [vmem:[#allocation2 + $0x68] sm:$0xff] %vm323, %v320
    %338 = vst.msk [vmem:[#allocation2 + $0x70] sm:$0xff] %vm323, %v321
    %339 = vst.msk [vmem:[#allocation2 + $0x78] sm:$0xff] %vm323, %v322
    // Predicated region
    $region42: #{netdeconf_forward.1} parent=1 // pred_check
      %p340 = pneg %p45
    $region43: #{netdeconf_forward.1} parent=1 // pred_check_branch
      %342 = sbr.rel (%p340) target = $region45
    $region44: #{netdeconf_forward.1} parent=1 // pred_region
      %v343 = vld [vmem:[#allocation2] sm:$0xff]
      %v344 = vld [vmem:[#allocation2 + $0x8] sm:$0xff]
      %v345 = vld [vmem:[#allocation2 + $0x10] sm:$0xff]
      %v346 = vld [vmem:[#allocation2 + $0x18] sm:$0xff]
      %v347 = vld [vmem:[#allocation2 + $0x20] sm:$0xff]
      %v348 = vld [vmem:[#allocation2 + $0x28] sm:$0xff]
      %v349 = vld [vmem:[#allocation2 + $0x30] sm:$0xff]
      %v350 = vld [vmem:[#allocation2 + $0x38] sm:$0xff]
      %v351 = vld [vmem:[#allocation2 + $0x40] sm:$0xff]
      %v352 = vld [vmem:[#allocation2 + $0x48] sm:$0xff]
      %v353 = vld [vmem:[#allocation2 + $0x50] sm:$0xff]
      %v354 = vld [vmem:[#allocation2 + $0x58] sm:$0xff]
      %v355 = vld [vmem:[#allocation2 + $0x60] sm:$0xff]
      %v356 = vld [vmem:[#allocation2 + $0x68] sm:$0xff]
      %v357 = vld [vmem:[#allocation2 + $0x70] sm:$0xff]
      %v358 = vld [vmem:[#allocation2 + $0x78] sm:$0xff]
      %v359 = vld [vmem:[%s3] sm:$0x1]
      %v361 = vlaneseq
      %v362 = vshrl.u32 %v361, 7
      %v363 = vsub.s32 0, %v362
      %v364 = vrot.slane %v359, %v363
      %v366 = vadd.f32 %v343, %v364
      %v367 = vadd.f32 %v344, %v364
      %v368 = vadd.f32 %v345, %v364
      %v369 = vadd.f32 %v346, %v364
      %v370 = vadd.f32 %v347, %v364
      %v371 = vadd.f32 %v348, %v364
      %v372 = vadd.f32 %v349, %v364
      %v373 = vadd.f32 %v350, %v364
      %v374 = vadd.f32 %v351, %v364
      %v375 = vadd.f32 %v352, %v364
      %v376 = vadd.f32 %v353, %v364
      %v377 = vadd.f32 %v354, %v364
      %v378 = vadd.f32 %v355, %v364
      %v379 = vadd.f32 %v356, %v364
      %v380 = vadd.f32 %v357, %v364
      %v381 = vadd.f32 %v358, %v364
      %v382 = vmax.f32 %v366, 0.0
      %v383 = vmax.f32 %v367, 0.0
      %v384 = vmax.f32 %v368, 0.0
      %v385 = vmax.f32 %v369, 0.0
      %v386 = vmax.f32 %v370, 0.0
      %v387 = vmax.f32 %v371, 0.0
      %v388 = vmax.f32 %v372, 0.0
      %v389 = vmax.f32 %v373, 0.0
      %v390 = vmax.f32 %v374, 0.0
      %v391 = vmax.f32 %v375, 0.0
      %v392 = vmax.f32 %v376, 0.0
      %v393 = vmax.f32 %v377, 0.0
      %v394 = vmax.f32 %v378, 0.0
      %v395 = vmax.f32 %v379, 0.0
      %v396 = vmax.f32 %v380, 0.0
      %v397 = vmax.f32 %v381, 0.0
      %398 = vst.msk [vmem:[%s8] sm:$0xff] %vm323, %v382
      %399 = vst.msk [vmem:[%s8 + $0x8] sm:$0xff] %vm323, %v383
      %400 = vst.msk [vmem:[%s8 + $0x10] sm:$0xff] %vm323, %v384
      %401 = vst.msk [vmem:[%s8 + $0x18] sm:$0xff] %vm323, %v385
      %402 = vst.msk [vmem:[%s8 + $0x20] sm:$0xff] %vm323, %v386
      %403 = vst.msk [vmem:[%s8 + $0x28] sm:$0xff] %vm323, %v387
      %404 = vst.msk [vmem:[%s8 + $0x30] sm:$0xff] %vm323, %v388
      %405 = vst.msk [vmem:[%s8 + $0x38] sm:$0xff] %vm323, %v389
      %406 = vst.msk [vmem:[%s8 + $0x40] sm:$0xff] %vm323, %v390
      %407 = vst.msk [vmem:[%s8 + $0x48] sm:$0xff] %vm323, %v391
      %408 = vst.msk [vmem:[%s8 + $0x50] sm:$0xff] %vm323, %v392
      %409 = vst.msk [vmem:[%s8 + $0x58] sm:$0xff] %vm323, %v393
      %410 = vst.msk [vmem:[%s8 + $0x60] sm:$0xff] %vm323, %v394
      %411 = vst.msk [vmem:[%s8 + $0x68] sm:$0xff] %vm323, %v395
      %412 = vst.msk [vmem:[%s8 + $0x70] sm:$0xff] %vm323, %v396
      %413 = vst.msk [vmem:[%s8 + $0x78] sm:$0xff] %vm323, %v397
      %v414 = vld [vmem:[%s4] sm:$0xff]
      %v415 = vld [vmem:[%s4 + $0x8] sm:$0xff]
      %v416 = vld [vmem:[%s4 + $0x10] sm:$0xff]
      %v417 = vld [vmem:[%s4 + $0x18] sm:$0xff]
      %v418 = vld [vmem:[%s5] sm:$0x1]
      %v420 = vlaneseq
      %v421 = vshrl.u32 %v420, 7
      %v422 = vsub.s32 0, %v421
      %v423 = vrot.slane %v418, %v422
      %v426 = vsel %vm323, %v382, 0
      %v429 = vsel %vm323, %v383, 0
      %v432 = vsel %vm323, %v384, 0
      %v435 = vsel %vm323, %v385, 0
      %v438 = vsel %vm323, %v386, 0
      %v441 = vsel %vm323, %v387, 0
      %v444 = vsel %vm323, %v388, 0
      %v447 = vsel %vm323, %v389, 0
      %v450 = vsel %vm323, %v390, 0
      %v453 = vsel %vm323, %v391, 0
      %v456 = vsel %vm323, %v392, 0
      %v459 = vsel %vm323, %v393, 0
      %v462 = vsel %vm323, %v394, 0
      %v465 = vsel %vm323, %v395, 0
      %v468 = vsel %vm323, %v396, 0
      %v471 = vsel %vm323, %v397, 0
      %473 = vmatprep.subr.mxu0 0.0
      %474 = vmatpush1.msra.mxu0 %v414
      %475 = vmatprep.subr.mxu0 0.0
      %476 = vmatpush1.msra.mxu0 %v415
      %477 = vmatprep.subr.mxu0 0.0
      %478 = vmatpush1.msra.mxu0 %v416
      %479 = vmatprep.subr.mxu0 0.0
      %480 = vmatpush1.msra.mxu0 %v417
      %481 = vmatprep.subr.mxu0 0.0
      %482 = vmatpush1.msra.mxu0 0.0
      %483 = vmatprep.subr.mxu0 0.0
      %484 = vmatpush1.msra.mxu0 0.0
      %485 = vmatprep.subr.mxu0 0.0
      %486 = vmatpush1.msra.mxu0 0.0
      %487 = vmatprep.subr.mxu0 0.0
      %488 = vmatpush1.msra.mxu0 0.0
      %489 = vmatprep.subr.mxu0 0.0
      %490 = vmatpush1.msra.mxu0 0.0
      %491 = vmatprep.subr.mxu0 0.0
      %492 = vmatpush1.msra.mxu0 0.0
      %493 = vmatprep.subr.mxu0 0.0
      %494 = vmatpush1.msra.mxu0 0.0
      %495 = vmatprep.subr.mxu0 0.0
      %496 = vmatpush1.msra.mxu0 0.0
      %497 = vmatprep.subr.mxu0 0.0
      %498 = vmatpush1.msra.mxu0 0.0
      %499 = vmatprep.subr.mxu0 0.0
      %500 = vmatpush1.msra.mxu0 0.0
      %501 = vmatprep.subr.mxu0 0.0
      %502 = vmatpush1.msra.mxu0 0.0
      %503 = vmatprep.subr.mxu0 0.0
      %504 = vmatpush1.msra.mxu0 0.0
      %505 = vmatprep.subr.mxu0 0.0
      %506 = vmatpush1.msra.mxu0 0.0
      %507 = vmatprep.subr.mxu0 0.0
      %508 = vmatpush1.msra.mxu0 0.0
      %509 = vmatprep.subr.mxu0 0.0
      %510 = vmatpush1.msra.mxu0 0.0
      %511 = vmatprep.subr.mxu0 0.0
      %512 = vmatpush1.msra.mxu0 0.0
      %513 = vmatprep.subr.mxu0 0.0
      %514 = vmatpush1.msra.mxu0 0.0
      %515 = vmatprep.subr.mxu0 0.0
      %516 = vmatpush1.msra.mxu0 0.0
      %517 = vmatprep.subr.mxu0 0.0
      %518 = vmatpush1.msra.mxu0 0.0
      %519 = vmatprep.subr.mxu0 0.0
      %520 = vmatpush1.msra.mxu0 0.0
      %521 = vmatprep.subr.mxu0 0.0
      %522 = vmatpush1.msra.mxu0 0.0
      %523 = vmatprep.subr.mxu0 0.0
      %524 = vmatpush1.msra.mxu0 0.0
      %525 = vmatprep.subr.mxu0 0.0
      %526 = vmatpush1.msra.mxu0 0.0
      %527 = vmatprep.subr.mxu0 0.0
      %528 = vmatpush1.msra.mxu0 0.0
      %529 = vmatprep.subr.mxu0 0.0
      %530 = vmatpush1.msra.mxu0 0.0
      %531 = vmatprep.subr.mxu0 0.0
      %532 = vmatpush1.msra.mxu0 0.0
      %533 = vmatprep.subr.mxu0 0.0
      %534 = vmatpush1.msra.mxu0 0.0
      %535 = vmatprep.subr.mxu0 0.0
      %536 = vmatpush1.msra.mxu0 0.0
      %537 = vmatprep.mubr.f32.mxu0 0.0
      %538 = vmatmul.mubr.f32.gmra.mrb[0].mxu0 %v426
      %v539 = vpop.f32.mrb[0].mxu0
      %v540 = vadd.f32 %v423, %v539
      %v541 = vpop.f32.mrb[0].mxu0
      %542 = vmatprep.mubr.f32.mxu0 0.0
      %543 = vmatmul.mubr.f32.gmra.mrb[0].mxu0 %v429
      %v544 = vpop.f32.mrb[0].mxu0
      %v545 = vadd.f32 %v423, %v544
      %v546 = vpop.f32.mrb[0].mxu0
      %547 = vmatprep.mubr.f32.mxu0 0.0
      %548 = vmatmul.mubr.f32.gmra.mrb[0].mxu0 %v432
      %v549 = vpop.f32.mrb[0].mxu0
      %v550 = vadd.f32 %v423, %v549
      %v551 = vpop.f32.mrb[0].mxu0
      %552 = vmatprep.mubr.f32.mxu0 0.0
      %553 = vmatmul.mubr.f32.gmra.mrb[0].mxu0 %v435
      %v554 = vpop.f32.mrb[0].mxu0
      %v555 = vadd.f32 %v423, %v554
      %v556 = vpop.f32.mrb[0].mxu0
      %557 = vmatprep.mubr.f32.mxu0 0.0
      %558 = vmatmul.mubr.f32.gmra.mrb[0].mxu0 %v438
      %v559 = vpop.f32.mrb[0].mxu0
      %v560 = vadd.f32 %v423, %v559
      %v561 = vpop.f32.mrb[0].mxu0
      %562 = vmatprep.mubr.f32.mxu0 0.0
      %563 = vmatmul.mubr.f32.gmra.mrb[0].mxu0 %v441
      %v564 = vpop.f32.mrb[0].mxu0
      %v565 = vadd.f32 %v423, %v564
      %v566 = vpop.f32.mrb[0].mxu0
      %567 = vmatprep.mubr.f32.mxu0 0.0
      %568 = vmatmul.mubr.f32.gmra.mrb[0].mxu0 %v444
      %v569 = vpop.f32.mrb[0].mxu0
      %v570 = vadd.f32 %v423, %v569
      %v571 = vpop.f32.mrb[0].mxu0
      %572 = vmatprep.mubr.f32.mxu0 0.0
      %573 = vmatmul.mubr.f32.gmra.mrb[0].mxu0 %v447
      %v574 = vpop.f32.mrb[0].mxu0
      %v575 = vadd.f32 %v423, %v574
      %v576 = vpop.f32.mrb[0].mxu0
      %577 = vmatprep.mubr.f32.mxu0 0.0
      %578 = vmatmul.mubr.f32.gmra.mrb[0].mxu0 %v450
      %v579 = vpop.f32.mrb[0].mxu0
      %v580 = vadd.f32 %v423, %v579
      %v581 = vpop.f32.mrb[0].mxu0
      %582 = vmatprep.mubr.f32.mxu0 0.0
      %583 = vmatmul.mubr.f32.gmra.mrb[0].mxu0 %v453
      %v584 = vpop.f32.mrb[0].mxu0
      %v585 = vadd.f32 %v423, %v584
      %v586 = vpop.f32.mrb[0].mxu0
      %587 = vmatprep.mubr.f32.mxu0 0.0
      %588 = vmatmul.mubr.f32.gmra.mrb[0].mxu0 %v456
      %v589 = vpop.f32.mrb[0].mxu0
      %v590 = vadd.f32 %v423, %v589
      %v591 = vpop.f32.mrb[0].mxu0
      %592 = vmatprep.mubr.f32.mxu0 0.0
      %593 = vmatmul.mubr.f32.gmra.mrb[0].mxu0 %v459
      %v594 = vpop.f32.mrb[0].mxu0
      %v595 = vadd.f32 %v423, %v594
      %v596 = vpop.f32.mrb[0].mxu0
      %597 = vmatprep.mubr.f32.mxu0 0.0
      %598 = vmatmul.mubr.f32.gmra.mrb[0].mxu0 %v462
      %v599 = vpop.f32.mrb[0].mxu0
      %v600 = vadd.f32 %v423, %v599
      %v601 = vpop.f32.mrb[0].mxu0
      %602 = vmatprep.mubr.f32.mxu0 0.0
      %603 = vmatmul.mubr.f32.gmra.mrb[0].mxu0 %v465
      %v604 = vpop.f32.mrb[0].mxu0
      %v605 = vadd.f32 %v423, %v604
      %v606 = vpop.f32.mrb[0].mxu0
      %607 = vmatprep.mubr.f32.mxu0 0.0
      %608 = vmatmul.mubr.f32.gmra.mrb[0].mxu0 %v468
      %v609 = vpop.f32.mrb[0].mxu0
      %v610 = vadd.f32 %v423, %v609
      %v611 = vpop.f32.mrb[0].mxu0
      %612 = vmatprep.mubr.f32.mxu0 0.0
      %613 = vmatmul.mubr.f32.gmra.mrb[0].mxu0 %v471
      %v614 = vpop.f32.mrb[0].mxu0
      %v615 = vadd.f32 %v423, %v614
      %v616 = vpop.f32.mrb[0].mxu0
      %617 = vdwg.mxu0
      %v618 = vmax.f32 %v540, 0.0
      %v619 = vmax.f32 %v545, 0.0
      %v620 = vmax.f32 %v550, 0.0
      %v621 = vmax.f32 %v555, 0.0
      %v622 = vmax.f32 %v560, 0.0
      %v623 = vmax.f32 %v565, 0.0
      %v624 = vmax.f32 %v570, 0.0
      %v625 = vmax.f32 %v575, 0.0
      %v626 = vmax.f32 %v580, 0.0
      %v627 = vmax.f32 %v585, 0.0
      %v628 = vmax.f32 %v590, 0.0
      %v629 = vmax.f32 %v595, 0.0
      %v630 = vmax.f32 %v600, 0.0
      %v631 = vmax.f32 %v605, 0.0
      %v632 = vmax.f32 %v610, 0.0
      %v633 = vmax.f32 %v615, 0.0
      %v634 = vld [vmem:[%s2] sm:$0xff]
      %v635 = vld [vmem:[%s2 + $0x8] sm:$0xff]
      %v636 = vld [vmem:[%s2 + $0x10] sm:$0xff]
      %v637 = vld [vmem:[%s2 + $0x18] sm:$0xff]
      %v638 = vld [vmem:[%s2 + $0x20] sm:$0xff]
      %v639 = vld [vmem:[%s2 + $0x28] sm:$0xff]
      %v640 = vld [vmem:[%s2 + $0x30] sm:$0xff]
      %v641 = vld [vmem:[%s2 + $0x38] sm:$0xff]
      %v642 = vld [vmem:[%s2 + $0x40] sm:$0xff]
      %v643 = vld [vmem:[%s2 + $0x48] sm:$0xff]
      %v644 = vld [vmem:[%s2 + $0x50] sm:$0xff]
      %v645 = vld [vmem:[%s2 + $0x58] sm:$0xff]
      %v646 = vld [vmem:[%s2 + $0x60] sm:$0xff]
      %v647 = vld [vmem:[%s2 + $0x68] sm:$0xff]
      %v648 = vld [vmem:[%s2 + $0x70] sm:$0xff]
      %v649 = vld [vmem:[%s2 + $0x78] sm:$0xff]
      %v650 = vlaneseq
      %v651 = vand.u32 %v650, 127
      %vm652 = vcmp.gt.f32.partialorder %v634, 0.0
      %vm653 = vcmp.gt.f32.partialorder %v635, 0.0
      %vm654 = vcmp.gt.f32.partialorder %v636, 0.0
      %vm655 = vcmp.gt.f32.partialorder %v637, 0.0
      %vm656 = vcmp.gt.f32.partialorder %v638, 0.0
      %vm657 = vcmp.gt.f32.partialorder %v639, 0.0
      %vm658 = vcmp.gt.f32.partialorder %v640, 0.0
      %vm659 = vcmp.gt.f32.partialorder %v641, 0.0
      %vm660 = vcmp.gt.f32.partialorder %v642, 0.0
      %vm661 = vcmp.gt.f32.partialorder %v643, 0.0
      %vm662 = vcmp.gt.f32.partialorder %v644, 0.0
      %vm663 = vcmp.gt.f32.partialorder %v645, 0.0
      %vm664 = vcmp.gt.f32.partialorder %v646, 0.0
      %vm665 = vcmp.gt.f32.partialorder %v647, 0.0
      %vm666 = vcmp.gt.f32.partialorder %v648, 0.0
      %vm667 = vcmp.gt.f32.partialorder %v649, 0.0
      %vm668 = vcmp.ge.s32.totalorder %v651, 32
      %v669 = vsel %vm668, %v618, 0.0
      %v670 = vsel %vm668, %v619, 0.0
      %v671 = vsel %vm668, %v620, 0.0
      %v672 = vsel %vm668, %v621, 0.0
      %v673 = vsel %vm668, %v622, 0.0
      %v674 = vsel %vm668, %v623, 0.0
      %v675 = vsel %vm668, %v624, 0.0
      %v676 = vsel %vm668, %v625, 0.0
      %v677 = vsel %vm668, %v626, 0.0
      %v678 = vsel %vm668, %v627, 0.0
      %v679 = vsel %vm668, %v628, 0.0
      %v680 = vsel %vm668, %v629, 0.0
      %v681 = vsel %vm668, %v630, 0.0
      %v682 = vsel %vm668, %v631, 0.0
      %v683 = vsel %vm668, %v632, 0.0
      %v684 = vsel %vm668, %v633, 0.0
      %vm685 = vcmp.lt.s32.totalorder %v651, 32
      %v686 = vsel %vm685, %v618, 0.0
      %v687 = vsel %vm685, %v619, 0.0
      %v688 = vsel %vm685, %v620, 0.0
      %v689 = vsel %vm685, %v621, 0.0
      %v690 = vsel %vm685, %v622, 0.0
      %v691 = vsel %vm685, %v623, 0.0
      %v692 = vsel %vm685, %v624, 0.0
      %v693 = vsel %vm685, %v625, 0.0
      %v694 = vsel %vm685, %v626, 0.0
      %v695 = vsel %vm685, %v627, 0.0
      %v696 = vsel %vm685, %v628, 0.0
      %v697 = vsel %vm685, %v629, 0.0
      %v698 = vsel %vm685, %v630, 0.0
      %v699 = vsel %vm685, %v631, 0.0
      %v700 = vsel %vm685, %v632, 0.0
      %v701 = vsel %vm685, %v633, 0.0
      %v702 = vsel %vm652, 1, 0
      %v703 = vsel %vm653, 1, 0
      %v704 = vsel %vm654, 1, 0
      %v705 = vsel %vm655, 1, 0
      %v706 = vsel %vm656, 1, 0
      %v707 = vsel %vm657, 1, 0
      %v708 = vsel %vm658, 1, 0
      %v709 = vsel %vm659, 1, 0
      %v710 = vsel %vm660, 1, 0
      %v711 = vsel %vm661, 1, 0
      %v712 = vsel %vm662, 1, 0
      %v713 = vsel %vm663, 1, 0
      %v714 = vsel %vm664, 1, 0
      %v715 = vsel %vm665, 1, 0
      %v716 = vsel %vm666, 1, 0
      %v717 = vsel %vm667, 1, 0
      %718 = vset.pattern.permute.xlu0 0
      %719 = vperm.xlu0 %718, %v702
      %v720 = vpop.permute.xlu0 %719
      %721 = vset.pattern.permute.xlu0 0
      %722 = vperm.xlu0 %721, %v703
      %v723 = vpop.permute.xlu0 %722
      %724 = vset.pattern.permute.xlu0 0
      %725 = vperm.xlu0 %724, %v704
      %v726 = vpop.permute.xlu0 %725
      %727 = vset.pattern.permute.xlu0 0
      %728 = vperm.xlu0 %727, %v705
      %v729 = vpop.permute.xlu0 %728
      %730 = vset.pattern.permute.xlu0 0
      %731 = vperm.xlu0 %730, %v706
      %v732 = vpop.permute.xlu0 %731
      %733 = vset.pattern.permute.xlu0 0
      %734 = vperm.xlu0 %733, %v707
      %v735 = vpop.permute.xlu0 %734
      %736 = vset.pattern.permute.xlu0 0
      %737 = vperm.xlu0 %736, %v708
      %v738 = vpop.permute.xlu0 %737
      %739 = vset.pattern.permute.xlu0 0
      %740 = vperm.xlu0 %739, %v709
      %v741 = vpop.permute.xlu0 %740
      %742 = vset.pattern.permute.xlu0 0
      %743 = vperm.xlu0 %742, %v710
      %v744 = vpop.permute.xlu0 %743
      %745 = vset.pattern.permute.xlu0 0
      %746 = vperm.xlu0 %745, %v711
      %v747 = vpop.permute.xlu0 %746
      %748 = vset.pattern.permute.xlu0 0
      %749 = vperm.xlu0 %748, %v712
      %v750 = vpop.permute.xlu0 %749
      %751 = vset.pattern.permute.xlu0 0
      %752 = vperm.xlu0 %751, %v713
      %v753 = vpop.permute.xlu0 %752
      %754 = vset.pattern.permute.xlu0 0
      %755 = vperm.xlu0 %754, %v714
      %v756 = vpop.permute.xlu0 %755
      %757 = vset.pattern.permute.xlu0 0
      %758 = vperm.xlu0 %757, %v715
      %v759 = vpop.permute.xlu0 %758
      %760 = vset.pattern.permute.xlu0 0
      %761 = vperm.xlu0 %760, %v716
      %v762 = vpop.permute.xlu0 %761
      %763 = vset.pattern.permute.xlu0 0
      %764 = vperm.xlu0 %763, %v717
      %v765 = vpop.permute.xlu0 %764
      %vm766 = vcmp.eq.s32.totalorder %v720, 1
      %vm767 = vcmp.eq.s32.totalorder %v723, 1
      %vm768 = vcmp.eq.s32.totalorder %v726, 1
      %vm769 = vcmp.eq.s32.totalorder %v729, 1
      %vm770 = vcmp.eq.s32.totalorder %v732, 1
      %vm771 = vcmp.eq.s32.totalorder %v735, 1
      %vm772 = vcmp.eq.s32.totalorder %v738, 1
      %vm773 = vcmp.eq.s32.totalorder %v741, 1
      %vm774 = vcmp.eq.s32.totalorder %v744, 1
      %vm775 = vcmp.eq.s32.totalorder %v747, 1
      %vm776 = vcmp.eq.s32.totalorder %v750, 1
      %vm777 = vcmp.eq.s32.totalorder %v753, 1
      %vm778 = vcmp.eq.s32.totalorder %v756, 1
      %vm779 = vcmp.eq.s32.totalorder %v759, 1
      %vm780 = vcmp.eq.s32.totalorder %v762, 1
      %vm781 = vcmp.eq.s32.totalorder %v765, 1
      %v782 = vsel %vm766, %v669, %v686
      %v783 = vsel %vm767, %v670, %v687
      %v784 = vsel %vm768, %v671, %v688
      %v785 = vsel %vm769, %v672, %v689
      %v786 = vsel %vm770, %v673, %v690
      %v787 = vsel %vm771, %v674, %v691
      %v788 = vsel %vm772, %v675, %v692
      %v789 = vsel %vm773, %v676, %v693
      %v790 = vsel %vm774, %v677, %v694
      %v791 = vsel %vm775, %v678, %v695
      %v792 = vsel %vm776, %v679, %v696
      %v793 = vsel %vm777, %v680, %v697
      %v794 = vsel %vm778, %v681, %v698
      %v795 = vsel %vm779, %v682, %v699
      %v796 = vsel %vm780, %v683, %v700
      %v797 = vsel %vm781, %v684, %v701
      %v798 = vld [vmem:[%s6] sm:$0xff]
      %v799 = vld [vmem:[%s6 + $0x8] sm:$0xff]
      %v800 = vld [vmem:[%s6 + $0x10] sm:$0xff]
      %v801 = vld [vmem:[%s6 + $0x18] sm:$0xff]
      %v802 = vld [vmem:[%s6 + $0x20] sm:$0xff]
      %v803 = vld [vmem:[%s6 + $0x28] sm:$0xff]
      %v804 = vld [vmem:[%s6 + $0x30] sm:$0xff]
      %v805 = vld [vmem:[%s6 + $0x38] sm:$0xff]
      %v806 = vld [vmem:[%s6 + $0x40] sm:$0xff]
      %v807 = vld [vmem:[%s6 + $0x48] sm:$0xff]
      %v808 = vld [vmem:[%s6 + $0x50] sm:$0xff]
      %v809 = vld [vmem:[%s6 + $0x58] sm:$0xff]
      %810 = vmatprep.subr.mxu0 0.0
      %811 = vmatpush1.msra.mxu0 %v806
      %812 = vmatprep.subr.mxu0 0.0
      %813 = vmatpush1.msra.mxu0 %v807
      %814 = vmatprep.subr.mxu0 0.0
      %815 = vmatpush1.msra.mxu0 %v808
      %816 = vmatprep.subr.mxu0 0.0
      %817 = vmatpush1.msra.mxu0 %v809
      %818 = vmatprep.subr.mxu0 0.0
      %819 = vmatpush1.msra.mxu0 0.0
      %820 = vmatprep.subr.mxu0 0.0
      %821 = vmatpush1.msra.mxu0 0.0
      %822 = vmatprep.subr.mxu0 0.0
      %823 = vmatpush1.msra.mxu0 0.0
      %824 = vmatprep.subr.mxu0 0.0
      %825 = vmatpush1.msra.mxu0 0.0
      %826 = vmatprep.subr.mxu0 0.0
      %827 = vmatpush1.msra.mxu0 0.0
      %828 = vmatprep.subr.mxu0 0.0
      %829 = vmatpush1.msra.mxu0 0.0
      %830 = vmatprep.subr.mxu0 0.0
      %831 = vmatpush1.msra.mxu0 0.0
      %832 = vmatprep.subr.mxu0 0.0
      %833 = vmatpush1.msra.mxu0 0.0
      %834 = vmatprep.subr.mxu0 0.0
      %835 = vmatpush1.msra.mxu0 0.0
      %836 = vmatprep.subr.mxu0 0.0
      %837 = vmatpush1.msra.mxu0 0.0
      %838 = vmatprep.subr.mxu0 0.0
      %839 = vmatpush1.msra.mxu0 0.0
      %840 = vmatprep.subr.mxu0 0.0
      %841 = vmatpush1.msra.mxu0 0.0
      %842 = vmatprep.subr.mxu0 0.0
      %843 = vmatpush1.msra.mxu0 0.0
      %844 = vmatprep.subr.mxu0 0.0
      %845 = vmatpush1.msra.mxu0 0.0
      %846 = vmatprep.subr.mxu0 0.0
      %847 = vmatpush1.msra.mxu0 0.0
      %848 = vmatprep.subr.mxu0 0.0
      %849 = vmatpush1.msra.mxu0 0.0
      %850 = vmatprep.subr.mxu0 0.0
      %851 = vmatpush1.msra.mxu0 0.0
      %852 = vmatprep.subr.mxu0 0.0
      %853 = vmatpush1.msra.mxu0 0.0
      %854 = vmatprep.subr.mxu0 0.0
      %855 = vmatpush1.msra.mxu0 0.0
      %856 = vmatprep.subr.mxu0 0.0
      %857 = vmatpush1.msra.mxu0 0.0
      %858 = vmatprep.subr.mxu0 0.0
      %859 = vmatpush1.msra.mxu0 0.0
      %860 = vmatprep.subr.mxu0 0.0
      %861 = vmatpush1.msra.mxu0 0.0
      %862 = vmatprep.subr.mxu0 0.0
      %863 = vmatpush1.msra.mxu0 0.0
      %864 = vmatprep.subr.mxu0 0.0
      %865 = vmatpush1.msra.mxu0 0.0
      %866 = vmatprep.subr.mxu0 0.0
      %867 = vmatpush1.msra.mxu0 0.0
      %868 = vmatprep.subr.mxu0 0.0
      %869 = vmatpush1.msra.mxu0 0.0
      %870 = vmatprep.subr.mxu0 0.0
      %871 = vmatpush1.msra.mxu0 0.0
      %872 = vmatprep.subr.mxu0 0.0
      %873 = vmatpush1.msra.mxu0 0.0
      %874 = vmatprep.mubr.f32.mxu0 0.0
      %875 = vmatmul.mubr.f32.gmra.mrb[0].mxu0 %v426
      %v876 = vpop.f32.mrb[0].mxu0
      %v877 = vadd.f32 0.0, %v876
      %v878 = vpop.f32.mrb[0].mxu0
      %879 = vmatprep.mubr.f32.mxu0 0.0
      %880 = vmatmul.mubr.f32.gmra.mrb[0].mxu0 %v429
      %v881 = vpop.f32.mrb[0].mxu0
      %v882 = vadd.f32 0.0, %v881
      %v883 = vpop.f32.mrb[0].mxu0
      %884 = vmatprep.mubr.f32.mxu0 0.0
      %885 = vmatmul.mubr.f32.gmra.mrb[0].mxu0 %v432
      %v886 = vpop.f32.mrb[0].mxu0
      %v887 = vadd.f32 0.0, %v886
      %v888 = vpop.f32.mrb[0].mxu0
      %889 = vmatprep.mubr.f32.mxu0 0.0
      %890 = vmatmul.mubr.f32.gmra.mrb[0].mxu0 %v435
      %v891 = vpop.f32.mrb[0].mxu0
      %v892 = vadd.f32 0.0, %v891
      %v893 = vpop.f32.mrb[0].mxu0
      %894 = vmatprep.mubr.f32.mxu0 0.0
      %895 = vmatmul.mubr.f32.gmra.mrb[0].mxu0 %v438
      %v896 = vpop.f32.mrb[0].mxu0
      %v897 = vadd.f32 0.0, %v896
      %v898 = vpop.f32.mrb[0].mxu0
      %899 = vmatprep.mubr.f32.mxu0 0.0
      %900 = vmatmul.mubr.f32.gmra.mrb[0].mxu0 %v441
      %v901 = vpop.f32.mrb[0].mxu0
      %v902 = vadd.f32 0.0, %v901
      %v903 = vpop.f32.mrb[0].mxu0
      %904 = vmatprep.mubr.f32.mxu0 0.0
      %905 = vmatmul.mubr.f32.gmra.mrb[0].mxu0 %v444
      %v906 = vpop.f32.mrb[0].mxu0
      %v907 = vadd.f32 0.0, %v906
      %v908 = vpop.f32.mrb[0].mxu0
      %909 = vmatprep.mubr.f32.mxu0 0.0
      %910 = vmatmul.mubr.f32.gmra.mrb[0].mxu0 %v447
      %v911 = vpop.f32.mrb[0].mxu0
      %v912 = vadd.f32 0.0, %v911
      %v913 = vpop.f32.mrb[0].mxu0
      %914 = vmatprep.mubr.f32.mxu0 0.0
      %915 = vmatmul.mubr.f32.gmra.mrb[0].mxu0 %v450
      %v916 = vpop.f32.mrb[0].mxu0
      %v917 = vadd.f32 0.0, %v916
      %v918 = vpop.f32.mrb[0].mxu0
      %919 = vmatprep.mubr.f32.mxu0 0.0
      %920 = vmatmul.mubr.f32.gmra.mrb[0].mxu0 %v453
      %v921 = vpop.f32.mrb[0].mxu0
      %v922 = vadd.f32 0.0, %v921
      %v923 = vpop.f32.mrb[0].mxu0
      %924 = vmatprep.mubr.f32.mxu0 0.0
      %925 = vmatmul.mubr.f32.gmra.mrb[0].mxu0 %v456
      %v926 = vpop.f32.mrb[0].mxu0
      %v927 = vadd.f32 0.0, %v926
      %v928 = vpop.f32.mrb[0].mxu0
      %929 = vmatprep.mubr.f32.mxu0 0.0
      %930 = vmatmul.mubr.f32.gmra.mrb[0].mxu0 %v459
      %v931 = vpop.f32.mrb[0].mxu0
      %v932 = vadd.f32 0.0, %v931
      %v933 = vpop.f32.mrb[0].mxu0
      %934 = vmatprep.mubr.f32.mxu0 0.0
      %935 = vmatmul.mubr.f32.gmra.mrb[0].mxu0 %v462
      %v936 = vpop.f32.mrb[0].mxu0
      %v937 = vadd.f32 0.0, %v936
      %v938 = vpop.f32.mrb[0].mxu0
      %939 = vmatprep.mubr.f32.mxu0 0.0
      %940 = vmatmul.mubr.f32.gmra.mrb[0].mxu0 %v465
      %v941 = vpop.f32.mrb[0].mxu0
      %v942 = vadd.f32 0.0, %v941
      %v943 = vpop.f32.mrb[0].mxu0
      %944 = vmatprep.mubr.f32.mxu0 0.0
      %945 = vmatmul.mubr.f32.gmra.mrb[0].mxu0 %v468
      %v946 = vpop.f32.mrb[0].mxu0
      %v947 = vadd.f32 0.0, %v946
      %v948 = vpop.f32.mrb[0].mxu0
      %949 = vmatprep.mubr.f32.mxu0 0.0
      %950 = vmatmul.mubr.f32.gmra.mrb[0].mxu0 %v471
      %v951 = vpop.f32.mrb[0].mxu0
      %v952 = vadd.f32 0.0, %v951
      %v953 = vpop.f32.mrb[0].mxu0
      %954 = vdwg.mxu0
      %vm955 = vcmask 523264
      %v957 = vsel %vm955, %v782, 0
      %v960 = vsel %vm955, %v783, 0
      %v963 = vsel %vm955, %v784, 0
      %v966 = vsel %vm955, %v785, 0
      %v969 = vsel %vm955, %v786, 0
      %v972 = vsel %vm955, %v787, 0
      %v975 = vsel %vm955, %v788, 0
      %v978 = vsel %vm955, %v789, 0
      %v981 = vsel %vm955, %v790, 0
      %v984 = vsel %vm955, %v791, 0
      %v987 = vsel %vm955, %v792, 0
      %v990 = vsel %vm955, %v793, 0
      %v993 = vsel %vm955, %v794, 0
      %v996 = vsel %vm955, %v795, 0
      %v999 = vsel %vm955, %v796, 0
      %v1002 = vsel %vm955, %v797, 0
      %1004 = vmatprep.subr.mxu0 0.0
      %1005 = vmatpush1.msra.mxu0 %v798
      %1006 = vmatprep.subr.mxu0 0.0
      %1007 = vmatpush1.msra.mxu0 %v799
      %1008 = vmatprep.subr.mxu0 0.0
      %1009 = vmatpush1.msra.mxu0 %v800
      %1010 = vmatprep.subr.mxu0 0.0
      %1011 = vmatpush1.msra.mxu0 %v801
      %1012 = vmatprep.subr.mxu0 0.0
      %1013 = vmatpush1.msra.mxu0 %v802
      %1014 = vmatprep.subr.mxu0 0.0
      %1015 = vmatpush1.msra.mxu0 %v803
      %1016 = vmatprep.subr.mxu0 0.0
      %1017 = vmatpush1.msra.mxu0 %v804
      %1018 = vmatprep.subr.mxu0 0.0
      %1019 = vmatpush1.msra.mxu0 %v805
      %1020 = vmatprep.subr.mxu0 0.0
      %1021 = vmatpush1.msra.mxu0 0.0
      %1022 = vmatprep.subr.mxu0 0.0
      %1023 = vmatpush1.msra.mxu0 0.0
      %1024 = vmatprep.subr.mxu0 0.0
      %1025 = vmatpush1.msra.mxu0 0.0
      %1026 = vmatprep.subr.mxu0 0.0
      %1027 = vmatpush1.msra.mxu0 0.0
      %1028 = vmatprep.subr.mxu0 0.0
      %1029 = vmatpush1.msra.mxu0 0.0
      %1030 = vmatprep.subr.mxu0 0.0
      %1031 = vmatpush1.msra.mxu0 0.0
      %1032 = vmatprep.subr.mxu0 0.0
      %1033 = vmatpush1.msra.mxu0 0.0
      %1034 = vmatprep.subr.mxu0 0.0
      %1035 = vmatpush1.msra.mxu0 0.0
      %1036 = vmatprep.subr.mxu0 0.0
      %1037 = vmatpush1.msra.mxu0 0.0
      %1038 = vmatprep.subr.mxu0 0.0
      %1039 = vmatpush1.msra.mxu0 0.0
      %1040 = vmatprep.subr.mxu0 0.0
      %1041 = vmatpush1.msra.mxu0 0.0
      %1042 = vmatprep.subr.mxu0 0.0
      %1043 = vmatpush1.msra.mxu0 0.0
      %1044 = vmatprep.subr.mxu0 0.0
      %1045 = vmatpush1.msra.mxu0 0.0
      %1046 = vmatprep.subr.mxu0 0.0
      %1047 = vmatpush1.msra.mxu0 0.0
      %1048 = vmatprep.subr.mxu0 0.0
      %1049 = vmatpush1.msra.mxu0 0.0
      %1050 = vmatprep.subr.mxu0 0.0
      %1051 = vmatpush1.msra.mxu0 0.0
      %1052 = vmatprep.subr.mxu0 0.0
      %1053 = vmatpush1.msra.mxu0 0.0
      %1054 = vmatprep.subr.mxu0 0.0
      %1055 = vmatpush1.msra.mxu0 0.0
      %1056 = vmatprep.subr.mxu0 0.0
      %1057 = vmatpush1.msra.mxu0 0.0
      %1058 = vmatprep.subr.mxu0 0.0
      %1059 = vmatpush1.msra.mxu0 0.0
      %1060 = vmatprep.subr.mxu0 0.0
      %1061 = vmatpush1.msra.mxu0 0.0
      %1062 = vmatprep.subr.mxu0 0.0
      %1063 = vmatpush1.msra.mxu0 0.0
      %1064 = vmatprep.subr.mxu0 0.0
      %1065 = vmatpush1.msra.mxu0 0.0
      %1066 = vmatprep.subr.mxu0 0.0
      %1067 = vmatpush1.msra.mxu0 0.0
      %1068 = vmatprep.mubr.f32.mxu0 0.0
      %1069 = vmatmul.mubr.f32.gmra.mrb[0].mxu0 %v957
      %v1070 = vpop.f32.mrb[0].mxu0
      %v1071 = vadd.f32 %v877, %v1070
      %v1072 = vpop.f32.mrb[0].mxu0
      %1073 = vmatprep.mubr.f32.mxu0 0.0
      %1074 = vmatmul.mubr.f32.gmra.mrb[0].mxu0 %v960
      %v1075 = vpop.f32.mrb[0].mxu0
      %v1076 = vadd.f32 %v882, %v1075
      %v1077 = vpop.f32.mrb[0].mxu0
      %1078 = vmatprep.mubr.f32.mxu0 0.0
      %1079 = vmatmul.mubr.f32.gmra.mrb[0].mxu0 %v963
      %v1080 = vpop.f32.mrb[0].mxu0
      %v1081 = vadd.f32 %v887, %v1080
      %v1082 = vpop.f32.mrb[0].mxu0
      %1083 = vmatprep.mubr.f32.mxu0 0.0
      %1084 = vmatmul.mubr.f32.gmra.mrb[0].mxu0 %v966
      %v1085 = vpop.f32.mrb[0].mxu0
      %v1086 = vadd.f32 %v892, %v1085
      %v1087 = vpop.f32.mrb[0].mxu0
      %1088 = vmatprep.mubr.f32.mxu0 0.0
      %1089 = vmatmul.mubr.f32.gmra.mrb[0].mxu0 %v969
      %v1090 = vpop.f32.mrb[0].mxu0
      %v1091 = vadd.f32 %v897, %v1090
      %v1092 = vpop.f32.mrb[0].mxu0
      %1093 = vmatprep.mubr.f32.mxu0 0.0
      %1094 = vmatmul.mubr.f32.gmra.mrb[0].mxu0 %v972
      %v1095 = vpop.f32.mrb[0].mxu0
      %v1096 = vadd.f32 %v902, %v1095
      %v1097 = vpop.f32.mrb[0].mxu0
      %1098 = vmatprep.mubr.f32.mxu0 0.0
      %1099 = vmatmul.mubr.f32.gmra.mrb[0].mxu0 %v975
      %v1100 = vpop.f32.mrb[0].mxu0
      %v1101 = vadd.f32 %v907, %v1100
      %v1102 = vpop.f32.mrb[0].mxu0
      %1103 = vmatprep.mubr.f32.mxu0 0.0
      %1104 = vmatmul.mubr.f32.gmra.mrb[0].mxu0 %v978
      %v1105 = vpop.f32.mrb[0].mxu0
      %v1106 = vadd.f32 %v912, %v1105
      %v1107 = vpop.f32.mrb[0].mxu0
      %1108 = vmatprep.mubr.f32.mxu0 0.0
      %1109 = vmatmul.mubr.f32.gmra.mrb[0].mxu0 %v981
      %v1110 = vpop.f32.mrb[0].mxu0
      %v1111 = vadd.f32 %v917, %v1110
      %v1112 = vpop.f32.mrb[0].mxu0
      %1113 = vmatprep.mubr.f32.mxu0 0.0
      %1114 = vmatmul.mubr.f32.gmra.mrb[0].mxu0 %v984
      %v1115 = vpop.f32.mrb[0].mxu0
      %v1116 = vadd.f32 %v922, %v1115
      %v1117 = vpop.f32.mrb[0].mxu0
      %1118 = vmatprep.mubr.f32.mxu0 0.0
      %1119 = vmatmul.mubr.f32.gmra.mrb[0].mxu0 %v987
      %v1120 = vpop.f32.mrb[0].mxu0
      %v1121 = vadd.f32 %v927, %v1120
      %v1122 = vpop.f32.mrb[0].mxu0
      %1123 = vmatprep.mubr.f32.mxu0 0.0
      %1124 = vmatmul.mubr.f32.gmra.mrb[0].mxu0 %v990
      %v1125 = vpop.f32.mrb[0].mxu0
      %v1126 = vadd.f32 %v932, %v1125
      %v1127 = vpop.f32.mrb[0].mxu0
      %1128 = vmatprep.mubr.f32.mxu0 0.0
      %1129 = vmatmul.mubr.f32.gmra.mrb[0].mxu0 %v993
      %v1130 = vpop.f32.mrb[0].mxu0
      %v1131 = vadd.f32 %v937, %v1130
      %v1132 = vpop.f32.mrb[0].mxu0
      %1133 = vmatprep.mubr.f32.mxu0 0.0
      %1134 = vmatmul.mubr.f32.gmra.mrb[0].mxu0 %v996
      %v1135 = vpop.f32.mrb[0].mxu0
      %v1136 = vadd.f32 %v942, %v1135
      %v1137 = vpop.f32.mrb[0].mxu0
      %1138 = vmatprep.mubr.f32.mxu0 0.0
      %1139 = vmatmul.mubr.f32.gmra.mrb[0].mxu0 %v999
      %v1140 = vpop.f32.mrb[0].mxu0
      %v1141 = vadd.f32 %v947, %v1140
      %v1142 = vpop.f32.mrb[0].mxu0
      %1143 = vmatprep.mubr.f32.mxu0 0.0
      %1144 = vmatmul.mubr.f32.gmra.mrb[0].mxu0 %v1002
      %v1145 = vpop.f32.mrb[0].mxu0
      %v1146 = vadd.f32 %v952, %v1145
      %v1147 = vpop.f32.mrb[0].mxu0
      %1148 = vdwg.mxu0
      %s1149 = sld [smem:[#allocation3 + $0x1]]
      %s1150 = sld [smem:[#allocation3]]
      %v1151 = vstv %s1149
      %v1152 = vstv %s1150
      %v1153 = vsel %vm652, %v1151, %v1152
      %v1154 = vsel %vm653, %v1151, %v1152
      %v1155 = vsel %vm654, %v1151, %v1152
      %v1156 = vsel %vm655, %v1151, %v1152
      %v1157 = vsel %vm656, %v1151, %v1152
      %v1158 = vsel %vm657, %v1151, %v1152
      %v1159 = vsel %vm658, %v1151, %v1152
      %v1160 = vsel %vm659, %v1151, %v1152
      %v1161 = vsel %vm660, %v1151, %v1152
      %v1162 = vsel %vm661, %v1151, %v1152
      %v1163 = vsel %vm662, %v1151, %v1152
      %v1164 = vsel %vm663, %v1151, %v1152
      %v1165 = vsel %vm664, %v1151, %v1152
      %v1166 = vsel %vm665, %v1151, %v1152
      %v1167 = vsel %vm666, %v1151, %v1152
      %v1168 = vsel %vm667, %v1151, %v1152
      %vm1169 = vcmp.eq.s32.totalorder %v651, 0
      %vm1170 = vcmp.eq.s32.totalorder %v651, 1
      %s1171 = sld [smem:[#allocation3 + $0x2]]
      %v1172 = vstv %s1171
      %v1173 = vsel %vm1170, %v1172, 0.0
      %1175 = vset.pattern.permute.xlu0 0
      %1176 = vperm.xlu0 %1175, %v1153
      %v1177 = vpop.permute.xlu0 %1176
      %1180 = vset.pattern.permute.xlu0 0
      %1181 = vperm.xlu0 %1180, %v1154
      %v1182 = vpop.permute.xlu0 %1181
      %1185 = vset.pattern.permute.xlu0 0
      %1186 = vperm.xlu0 %1185, %v1155
      %v1187 = vpop.permute.xlu0 %1186
      %1190 = vset.pattern.permute.xlu0 0
      %1191 = vperm.xlu0 %1190, %v1156
      %v1192 = vpop.permute.xlu0 %1191
      %1195 = vset.pattern.permute.xlu0 0
      %1196 = vperm.xlu0 %1195, %v1157
      %v1197 = vpop.permute.xlu0 %1196
      %1200 = vset.pattern.permute.xlu0 0
      %1201 = vperm.xlu0 %1200, %v1158
      %v1202 = vpop.permute.xlu0 %1201
      %1205 = vset.pattern.permute.xlu0 0
      %1206 = vperm.xlu0 %1205, %v1159
      %v1207 = vpop.permute.xlu0 %1206
      %1210 = vset.pattern.permute.xlu0 0
      %1211 = vperm.xlu0 %1210, %v1160
      %v1212 = vpop.permute.xlu0 %1211
      %1215 = vset.pattern.permute.xlu0 0
      %1216 = vperm.xlu0 %1215, %v1161
      %v1217 = vpop.permute.xlu0 %1216
      %1220 = vset.pattern.permute.xlu0 0
      %1221 = vperm.xlu0 %1220, %v1162
      %v1222 = vpop.permute.xlu0 %1221
      %1225 = vset.pattern.permute.xlu0 0
      %1226 = vperm.xlu0 %1225, %v1163
      %v1227 = vpop.permute.xlu0 %1226
      %1230 = vset.pattern.permute.xlu0 0
      %1231 = vperm.xlu0 %1230, %v1164
      %v1232 = vpop.permute.xlu0 %1231
      %1235 = vset.pattern.permute.xlu0 0
      %1236 = vperm.xlu0 %1235, %v1165
      %v1237 = vpop.permute.xlu0 %1236
      %1240 = vset.pattern.permute.xlu0 0
      %1241 = vperm.xlu0 %1240, %v1166
      %v1242 = vpop.permute.xlu0 %1241
      %1245 = vset.pattern.permute.xlu0 0
      %1246 = vperm.xlu0 %1245, %v1167
      %v1247 = vpop.permute.xlu0 %1246
      %1250 = vset.pattern.permute.xlu0 0
      %1251 = vperm.xlu0 %1250, %v1168
      %v1252 = vpop.permute.xlu0 %1251
      %v1254 = vsel %vm1169, %v1177, %v1173
      %v1255 = vsel %vm1169, %v1182, %v1173
      %v1256 = vsel %vm1169, %v1187, %v1173
      %v1257 = vsel %vm1169, %v1192, %v1173
      %v1258 = vsel %vm1169, %v1197, %v1173
      %v1259 = vsel %vm1169, %v1202, %v1173
      %v1260 = vsel %vm1169, %v1207, %v1173
      %v1261 = vsel %vm1169, %v1212, %v1173
      %v1262 = vsel %vm1169, %v1217, %v1173
      %v1263 = vsel %vm1169, %v1222, %v1173
      %v1264 = vsel %vm1169, %v1227, %v1173
      %v1265 = vsel %vm1169, %v1232, %v1173
      %v1266 = vsel %vm1169, %v1237, %v1173
      %v1267 = vsel %vm1169, %v1242, %v1173
      %v1268 = vsel %vm1169, %v1247, %v1173
      %v1269 = vsel %vm1169, %v1252, %v1173
      %v1270 = vadd.f32 %v1071, %v1254
      %v1271 = vadd.f32 %v1076, %v1255
      %v1272 = vadd.f32 %v1081, %v1256
      %v1273 = vadd.f32 %v1086, %v1257
      %v1274 = vadd.f32 %v1091, %v1258
      %v1275 = vadd.f32 %v1096, %v1259
      %v1276 = vadd.f32 %v1101, %v1260
      %v1277 = vadd.f32 %v1106, %v1261
      %v1278 = vadd.f32 %v1111, %v1262
      %v1279 = vadd.f32 %v1116, %v1263
      %v1280 = vadd.f32 %v1121, %v1264
      %v1281 = vadd.f32 %v1126, %v1265
      %v1282 = vadd.f32 %v1131, %v1266
      %v1283 = vadd.f32 %v1136, %v1267
      %v1284 = vadd.f32 %v1141, %v1268
      %v1285 = vadd.f32 %v1146, %v1269
      %v1286 = vxor.u32 %v1270, 2147483648
      %v1287 = vxor.u32 %v1271, 2147483648
      %v1288 = vxor.u32 %v1272, 2147483648
      %v1289 = vxor.u32 %v1273, 2147483648
      %v1290 = vxor.u32 %v1274, 2147483648
      %v1291 = vxor.u32 %v1275, 2147483648
      %v1292 = vxor.u32 %v1276, 2147483648
      %v1293 = vxor.u32 %v1277, 2147483648
      %v1294 = vxor.u32 %v1278, 2147483648
      %v1295 = vxor.u32 %v1279, 2147483648
      %v1296 = vxor.u32 %v1280, 2147483648
      %v1297 = vxor.u32 %v1281, 2147483648
      %v1298 = vxor.u32 %v1282, 2147483648
      %v1299 = vxor.u32 %v1283, 2147483648
      %v1300 = vxor.u32 %v1284, 2147483648
      %v1301 = vxor.u32 %v1285, 2147483648
      %v1302 = vmul.f32 %v1286, 1.442695
      %v1303 = vpow.pop %v1302
      %v1304 = vmul.f32 %v1287, 1.442695
      %v1305 = vpow.pop %v1304
      %v1306 = vmul.f32 %v1288, 1.442695
      %v1307 = vpow.pop %v1306
      %v1308 = vmul.f32 %v1289, 1.442695
      %v1309 = vpow.pop %v1308
      %v1310 = vmul.f32 %v1290, 1.442695
      %v1311 = vpow.pop %v1310
      %v1312 = vmul.f32 %v1291, 1.442695
      %v1313 = vpow.pop %v1312
      %v1314 = vmul.f32 %v1292, 1.442695
      %v1315 = vpow.pop %v1314
      %v1316 = vmul.f32 %v1293, 1.442695
      %v1317 = vpow.pop %v1316
      %v1318 = vmul.f32 %v1294, 1.442695
      %v1319 = vpow.pop %v1318
      %v1320 = vmul.f32 %v1295, 1.442695
      %v1321 = vpow.pop %v1320
      %v1322 = vmul.f32 %v1296, 1.442695
      %v1323 = vpow.pop %v1322
      %v1324 = vmul.f32 %v1297, 1.442695
      %v1325 = vpow.pop %v1324
      %v1326 = vmul.f32 %v1298, 1.442695
      %v1327 = vpow.pop %v1326
      %v1328 = vmul.f32 %v1299, 1.442695
      %v1329 = vpow.pop %v1328
      %v1330 = vmul.f32 %v1300, 1.442695
      %v1331 = vpow.pop %v1330
      %v1332 = vmul.f32 %v1301, 1.442695
      %v1333 = vpow.pop %v1332
      %v1334 = vadd.f32 %v1303, 1.0
      %v1335 = vadd.f32 %v1305, 1.0
      %v1336 = vadd.f32 %v1307, 1.0
      %v1337 = vadd.f32 %v1309, 1.0
      %v1338 = vadd.f32 %v1311, 1.0
      %v1339 = vadd.f32 %v1313, 1.0
      %v1340 = vadd.f32 %v1315, 1.0
      %v1341 = vadd.f32 %v1317, 1.0
      %v1342 = vadd.f32 %v1319, 1.0
      %v1343 = vadd.f32 %v1321, 1.0
      %v1344 = vadd.f32 %v1323, 1.0
      %v1345 = vadd.f32 %v1325, 1.0
      %v1346 = vadd.f32 %v1327, 1.0
      %v1347 = vadd.f32 %v1329, 1.0
      %v1348 = vadd.f32 %v1331, 1.0
      %v1349 = vadd.f32 %v1333, 1.0
      %v1350 = vrcp.pop %v1334
      %v1351 = vmul.f32 1.0, %v1350
      %v1352 = vrcp.pop %v1335
      %v1353 = vmul.f32 1.0, %v1352
      %v1354 = vrcp.pop %v1336
      %v1355 = vmul.f32 1.0, %v1354
      %v1356 = vrcp.pop %v1337
      %v1357 = vmul.f32 1.0, %v1356
      %v1358 = vrcp.pop %v1338
      %v1359 = vmul.f32 1.0, %v1358
      %v1360 = vrcp.pop %v1339
      %v1361 = vmul.f32 1.0, %v1360
      %v1362 = vrcp.pop %v1340
      %v1363 = vmul.f32 1.0, %v1362
      %v1364 = vrcp.pop %v1341
      %v1365 = vmul.f32 1.0, %v1364
      %v1366 = vrcp.pop %v1342
      %v1367 = vmul.f32 1.0, %v1366
      %v1368 = vrcp.pop %v1343
      %v1369 = vmul.f32 1.0, %v1368
      %v1370 = vrcp.pop %v1344
      %v1371 = vmul.f32 1.0, %v1370
      %v1372 = vrcp.pop %v1345
      %v1373 = vmul.f32 1.0, %v1372
      %v1374 = vrcp.pop %v1346
      %v1375 = vmul.f32 1.0, %v1374
      %v1376 = vrcp.pop %v1347
      %v1377 = vmul.f32 1.0, %v1376
      %v1378 = vrcp.pop %v1348
      %v1379 = vmul.f32 1.0, %v1378
      %v1380 = vrcp.pop %v1349
      %v1381 = vmul.f32 1.0, %v1380
      %v1382 = vsel %vm1170, %v1351, %v1270
      %v1383 = vsel %vm1170, %v1353, %v1271
      %v1384 = vsel %vm1170, %v1355, %v1272
      %v1385 = vsel %vm1170, %v1357, %v1273
      %v1386 = vsel %vm1170, %v1359, %v1274
      %v1387 = vsel %vm1170, %v1361, %v1275
      %v1388 = vsel %vm1170, %v1363, %v1276
      %v1389 = vsel %vm1170, %v1365, %v1277
      %v1390 = vsel %vm1170, %v1367, %v1278
      %v1391 = vsel %vm1170, %v1369, %v1279
      %v1392 = vsel %vm1170, %v1371, %v1280
      %v1393 = vsel %vm1170, %v1373, %v1281
      %v1394 = vsel %vm1170, %v1375, %v1282
      %v1395 = vsel %vm1170, %v1377, %v1283
      %v1396 = vsel %vm1170, %v1379, %v1284
      %v1397 = vsel %vm1170, %v1381, %v1285
      %1398 = vst [vmem:[%s9] sm:$0xff] %v1382
      %1399 = vst [vmem:[%s9 + $0x8] sm:$0xff] %v1383
      %1400 = vst [vmem:[%s9 + $0x10] sm:$0xff] %v1384
      %1401 = vst [vmem:[%s9 + $0x18] sm:$0xff] %v1385
      %1402 = vst [vmem:[%s9 + $0x20] sm:$0xff] %v1386
      %1403 = vst [vmem:[%s9 + $0x28] sm:$0xff] %v1387
      %1404 = vst [vmem:[%s9 + $0x30] sm:$0xff] %v1388
      %1405 = vst [vmem:[%s9 + $0x38] sm:$0xff] %v1389
      %1406 = vst [vmem:[%s9 + $0x40] sm:$0xff] %v1390
      %1407 = vst [vmem:[%s9 + $0x48] sm:$0xff] %v1391
      %1408 = vst [vmem:[%s9 + $0x50] sm:$0xff] %v1392
      %1409 = vst [vmem:[%s9 + $0x58] sm:$0xff] %v1393
      %1410 = vst [vmem:[%s9 + $0x60] sm:$0xff] %v1394
      %1411 = vst [vmem:[%s9 + $0x68] sm:$0xff] %v1395
      %1412 = vst [vmem:[%s9 + $0x70] sm:$0xff] %v1396
      %1413 = vst [vmem:[%s9 + $0x78] sm:$0xff] %v1397
    $region45: #{netdeconf_forward.1} parent=1 // pred_fallthru
      _
    // Predicated region
    $region46: #{netdeconf_forward.1} parent=1 // pred_check
      _
    $region47: #{netdeconf_forward.1} parent=1 // pred_check_branch
      %1415 = sbr.rel (0) target = $region49
    $region48: #{netdeconf_forward.1} parent=1 // pred_region
      _
    $region49: #{netdeconf_forward.1} parent=1 // pred_fallthru
      _
    // Predicated region
    $region50: #{netdeconf_forward.1} parent=1 // pred_check
      _
    $region51: #{netdeconf_forward.1} parent=1 // pred_check_branch
      %1417 = sbr.rel (0) target = $region53
    $region52: #{netdeconf_forward.1} parent=1 // pred_region
      _
    $region53: #{netdeconf_forward.1} parent=1 // pred_fallthru
      _
    // Predicated region
    $region54: #{netdeconf_forward.1} parent=1 // pred_check
      _
    $region55: #{netdeconf_forward.1} parent=1 // pred_check_branch
      %1419 = sbr.rel (0) target = $region57
    $region56: #{netdeconf_forward.1} parent=1 // pred_region
      _
    $region57: #{netdeconf_forward.1} parent=1 // pred_fallthru
      _
    // Predicated region
    $region58: #{netdeconf_forward.1} parent=1 // pred_check
      _
    $region59: #{netdeconf_forward.1} parent=1 // pred_check_branch
      %1421 = sbr.rel (0) target = $region61
    $region60: #{netdeconf_forward.1} parent=1 // pred_region
      _
    $region61: #{netdeconf_forward.1} parent=1 // pred_fallthru
      _
    %1422 = vsyncpa [#allocation4], 1

</llo_original>
